<compile_context>
chip_gen: v5e
topology: v5e:2x2
jax: 0.10.0
libtpu: 0.0.40
codegen_flags: <defaults>
</compile_context>

<pallas_src>
import functools

import jax
import jax.numpy as jnp
from jax.experimental import pallas as pl
from jax.experimental.pallas import tpu as pltpu

BN_EPS = 1e-5
LANES = 128      # output columns padded to lane width -> unmasked vst stores
SUBLANES = 8
TM_MAX = 512     # M-tile size: ~85% of HBM roofline per tile sweep, v7x-safe


def _round_up(x, m):
    return (x + m - 1) // m * m


# ---------------------------------------------------------------------------
# Pallas kernels: fused  out = [relu]( A @ W + bias [+ residual] )
#   A, W are bf16 (MXU-native on v5e/v6e/v7x); accumulate + epilogue in f32.
#   Two specializations so the no-residual path never streams a zero tensor.
# ---------------------------------------------------------------------------
def _mm_bias_kernel(relu, a_ref, w_ref, b_ref, o_ref):
    acc = jnp.dot(a_ref[...], w_ref[...], preferred_element_type=jnp.float32)
    acc = acc + b_ref[...]
    if relu:
        acc = jnp.maximum(acc, 0.0)
    o_ref[...] = acc.astype(o_ref.dtype)


def _mm_bias_res_kernel(relu, a_ref, w_ref, b_ref, r_ref, o_ref):
    acc = jnp.dot(a_ref[...], w_ref[...], preferred_element_type=jnp.float32)
    acc = acc + b_ref[...] + r_ref[...]
    if relu:
        acc = jnp.maximum(acc, 0.0)
    o_ref[...] = acc.astype(o_ref.dtype)


def fused_matmul(a, w_pad, b_pad, res=None, relu=False):
    """a: (M, K) float; w_pad: (Kp, Np) bf16 with Np % 128 == 0, Kp % 8 == 0;
    b_pad: (1, Np) f32; res: optional (M, Np) f32 residual.
    Returns (M, Np) f32 — caller slices the valid columns."""
    M, K = a.shape
    Kp, Np = w_pad.shape
    assert Np % LANES == 0 and Kp % SUBLANES == 0

    a = a.astype(jnp.bfloat16)
    if Kp != K:                       # zero-pad K; padded weight rows are zero
        a = jnp.pad(a, ((0, 0), (0, Kp - K)))

    tm = min(TM_MAX, _round_up(M, SUBLANES))
    mp = _round_up(M, tm)
    if mp != M:
        a = jnp.pad(a, ((0, mp - M), (0, 0)))
        if res is not None:
            res = jnp.pad(res, ((0, mp - M), (0, 0)))
    grid = (mp // tm,)

    a_spec = pl.BlockSpec((tm, Kp), lambda i: (i, 0))
    w_spec = pl.BlockSpec((Kp, Np), lambda i: (0, 0))
    b_spec = pl.BlockSpec((1, Np), lambda i: (0, 0))
    o_spec = pl.BlockSpec((tm, Np), lambda i: (i, 0))
    cparams = pltpu.CompilerParams(
        dimension_semantics=("parallel",),   # M tiles shard across v7x's 2 TCs
        vmem_limit_bytes=32 * 1024 * 1024,   # fits v7x (64 MiB phys) comfortably
    )

    if res is None:
        out = pl.pallas_call(
            functools.partial(_mm_bias_kernel, relu),
            out_shape=jax.ShapeDtypeStruct((mp, Np), jnp.float32),
            grid=grid,
            in_specs=[a_spec, w_spec, b_spec],
            out_specs=o_spec,
            compiler_params=cparams,
        )(a, w_pad, b_pad)
    else:
        r_spec = pl.BlockSpec((tm, Np), lambda i: (i, 0))
        out = pl.pallas_call(
            functools.partial(_mm_bias_res_kernel, relu),
            out_shape=jax.ShapeDtypeStruct((mp, Np), jnp.float32),
            grid=grid,
            in_specs=[a_spec, w_spec, b_spec, r_spec],
            out_specs=o_spec,
            compiler_params=cparams,
        )(a, w_pad, b_pad, res.astype(jnp.float32))
    return out[:M]


# ---------------------------------------------------------------------------
# Glue: im2col (patch extraction) and conv+BN folding, plain JAX.
# ---------------------------------------------------------------------------
def im2col(x_nhwc, k, stride, pad):
    N, H, W, C = x_nhwc.shape
    xp = jnp.pad(x_nhwc, ((0, 0), (pad, pad), (pad, pad), (0, 0)))
    Ho = (H + 2 * pad - k) // stride + 1
    Wo = (W + 2 * pad - k) // stride + 1
    cols = []
    for di in range(k):
        for dj in range(k):
            cols.append(xp[:, di:di + stride * Ho:stride,
                           dj:dj + stride * Wo:stride, :])  # (N, Ho, Wo, C)
    patches = jnp.stack(cols, axis=-2)                      # (N, Ho, Wo, k*k, C)
    return patches.reshape(N * Ho * Wo, k * k * C), (N, Ho, Wo)


def fold_conv_bn(w_oihw, bn):
    """Fold eval-mode BatchNorm into conv weights. Returns (K, Cout) weight, (Cout,) bias."""
    gamma, beta, mean, var = bn
    scale = gamma / jnp.sqrt(var + BN_EPS)
    # (Cout, Cin, kh, kw) -> (kh, kw, Cin, Cout), matching im2col's (k*k, Cin) ordering.
    w = jnp.transpose(w_oihw, (2, 3, 1, 0))
    k_h, k_w, cin, cout = w.shape
    w = w.reshape(k_h * k_w * cin, cout) * scale[None, :]
    bias = beta - mean * scale
    return w, bias


def _pack_wb(w, b):
    """Pad (K, N) weight / (N,) bias to (Kp, Np) lane-dense, bf16 / f32."""
    K, N = w.shape
    Kp = _round_up(K, SUBLANES)
    Np = _round_up(N, LANES)
    wp = jnp.pad(w, ((0, Kp - K), (0, Np - N))).astype(jnp.bfloat16)
    bp = jnp.pad(b, (0, Np - N)).reshape(1, Np).astype(jnp.float32)
    return wp, bp


# ---------------------------------------------------------------------------
# Parameter init (deterministic, synthetic) + one-time kernel-ready packing.
# ---------------------------------------------------------------------------
def _bn_params(key, c):
    k1, k2, k3, k4 = jax.random.split(key, 4)
    gamma = 1.0 + 0.1 * jax.random.normal(k1, (c,), jnp.float32)
    beta = 0.1 * jax.random.normal(k2, (c,), jnp.float32)
    mean = 0.1 * jax.random.normal(k3, (c,), jnp.float32)
    var = 1.0 + 0.1 * jax.random.uniform(k4, (c,), jnp.float32)
    return gamma, beta, mean, var


def init_params(key, in_ch, planes, nclasses, feat_hw):
    ks = jax.random.split(key, 8)
    p = {}
    p["stem_w"] = 0.1 * jax.random.normal(ks[0], (planes, in_ch, 3, 3), jnp.float32)
    p["stem_bn"] = _bn_params(ks[1], planes)
    p["c1_w"] = 0.1 * jax.random.normal(ks[2], (planes, planes, 3, 3), jnp.float32)
    p["bn1"] = _bn_params(ks[3], planes)
    p["c2_w"] = 0.1 * jax.random.normal(ks[4], (planes, planes, 3, 3), jnp.float32)
    p["bn2"] = _bn_params(ks[5], planes)
    fan_in = planes * feat_hw * feat_hw
    p["fc_w"] = 0.05 * jax.random.normal(ks[6], (nclasses, fan_in), jnp.float32)
    p["fc_b"] = 0.05 * jax.random.normal(ks[7], (nclasses,), jnp.float32)
    return p


def prepare_params(params):
    """Fold BN, transpose, pad (K->mult of 8, N->mult of 128), cast to bf16 — once."""
    prep = {}
    w, b = fold_conv_bn(params["stem_w"], params["stem_bn"])
    prep["stem_w"], prep["stem_b"] = _pack_wb(w, b)
    w, b = fold_conv_bn(params["c1_w"], params["bn1"])
    prep["c1_w"], prep["c1_b"] = _pack_wb(w, b)
    w, b = fold_conv_bn(params["c2_w"], params["bn2"])
    prep["c2_w"], prep["c2_b"] = _pack_wb(w, b)
    # fc kept in (K, N) layout at init — no per-forward transpose.
    prep["fc_w"], prep["fc_b"] = _pack_wb(params["fc_w"].T, params["fc_b"])
    return prep


# ---------------------------------------------------------------------------
# Forward pass of ScalableResNet (growth=[]  ->  NG_block is empty).
# ---------------------------------------------------------------------------
def scalable_resnet_forward(prep, x_nchw, planes, nclasses):
    x = jnp.transpose(x_nchw, (0, 2, 3, 1)).astype(jnp.bfloat16)  # NCHW -> NHWC

    # --- NE.features: stem conv 3x3 stride 2 + BN + ReLU ---
    a, (n, ho, wo) = im2col(x, k=3, stride=2, pad=1)
    h0p = fused_matmul(a, prep["stem_w"], prep["stem_b"], relu=True)   # (M, 128)
    h0 = h0p[:, :planes].reshape(n, ho, wo, planes)

    # --- NE.features: one BasicBlock (conv-BN-ReLU, conv-BN, +residual, ReLU) ---
    a, _ = im2col(h0.astype(jnp.bfloat16), k=3, stride=1, pad=1)
    h1p = fused_matmul(a, prep["c1_w"], prep["c1_b"], relu=True)
    h1 = h1p[:, :planes].reshape(n, ho, wo, planes)

    a, _ = im2col(h1.astype(jnp.bfloat16), k=3, stride=1, pad=1)
    # residual passed lane-dense (padded cols are exactly zero), no zero tensor built.
    h2p = fused_matmul(a, prep["c2_w"], prep["c2_b"], res=h0p, relu=True)
    h2 = h2p[:, :planes].reshape(n, ho, wo, planes)

    # --- NG: NG_block is empty (growth=[]); NG_pred = Flatten + Linear ---
    # PyTorch Flatten operates on NCHW, so flatten in (C, H, W) order.
    feat = jnp.transpose(h2, (0, 3, 1, 2)).reshape(n, -1)
    logits_p = fused_matmul(feat, prep["fc_w"], prep["fc_b"], relu=False)
    return logits_p[:, :nclasses]


# ---------------------------------------------------------------------------
if __name__ == "__main__":
    NCLASSES = 10
    IN_CH = 3
    FEATURES_PLANES = 32   # NE.features_planes
    FEAT_HW = 8            # NG input_size = [8, 8]
    BATCH = 2
    SPATIAL = 16           # stride-2 stem: 16 -> 8

    key = jax.random.PRNGKey(0)
    k_param, k_x = jax.random.split(key)
    params = init_params(k_param, IN_CH, FEATURES_PLANES, NCLASSES, FEAT_HW)
    prep = prepare_params(params)          # fold/pad/cast weights once at init
    x = jax.random.normal(k_x, (BATCH, IN_CH, SPATIAL, SPATIAL), jnp.float32)

    forward = jax.jit(functools.partial(
        scalable_resnet_forward, planes=FEATURES_PLANES, nclasses=NCLASSES))

    logits = forward(prep, x)
    logits = jax.block_until_ready(logits)
    assert logits.shape == (BATCH, NCLASSES), logits.shape
    print("KERNEL_OK")
</pallas_src>

<mosaic_0001>
module attributes {stable_mosaic.version = 11 : i64} {
  func.func @_mm_bias_kernel(%arg0: i32, %arg1: memref<128x32xbf16, #tpu.memory_space<vmem>>, %arg2: memref<32x128xbf16, #tpu.memory_space<vmem>>, %arg3: memref<1x128xf32, #tpu.memory_space<vmem>>, %arg4: memref<128x128xf32, #tpu.memory_space<vmem>>) attributes {dimension_semantics = [#tpu.dimension_semantics<parallel>], iteration_bounds = array<i64: 1>, scalar_prefetch = 0 : i64, scratch_operands = 0 : i64, tpu.core_type = #tpu.core_type<tc>, window_params = [{transform_indices = @transform_0, window_bounds = array<i64: 128, 32>}, {pipeline_mode = #tpu.pipeline_mode<synchronous>, transform_indices = @transform_1, window_bounds = array<i64: 32, 128>}, {pipeline_mode = #tpu.pipeline_mode<synchronous>, transform_indices = @transform_2, window_bounds = array<i64: 1, 128>}, {transform_indices = @transform_3, window_bounds = array<i64: 128, 128>}]} {
    %c0 = arith.constant 0 : index
    %c0_0 = arith.constant 0 : index
    %0 = vector.load %arg1[%c0, %c0_0] : memref<128x32xbf16, #tpu.memory_space<vmem>>, vector<128x32xbf16>
    %c0_1 = arith.constant 0 : index
    %c0_2 = arith.constant 0 : index
    %1 = vector.load %arg2[%c0_1, %c0_2] : memref<32x128xbf16, #tpu.memory_space<vmem>>, vector<32x128xbf16>
    %cst = arith.constant dense<0.000000e+00> : vector<128x128xf32>
    %2 = tpu.matmul %0, %1, %cst {dimension_numbers = #tpu.dot_dimension_numbers<[1], [0], [0], [1], [0, 0, 1, 1], [], []>} : vector<128x32xbf16>, vector<32x128xbf16>, vector<128x128xf32> -> vector<128x128xf32>
    %c0_3 = arith.constant 0 : index
    %c0_4 = arith.constant 0 : index
    %3 = vector.load %arg3[%c0_3, %c0_4] : memref<1x128xf32, #tpu.memory_space<vmem>>, vector<1x128xf32>
    %4 = vector.broadcast %3 : vector<1x128xf32> to vector<128x128xf32>
    %5 = arith.addf %2, %4 : vector<128x128xf32>
    %cst_5 = arith.constant 0.000000e+00 : f32
    %6 = vector.broadcast %cst_5 : f32 to vector<128x128xf32>
    %7 = arith.maximumf %5, %6 : vector<128x128xf32>
    %c0_6 = arith.constant 0 : index
    %c0_7 = arith.constant 0 : index
    %8 = vector.load %arg4[%c0_6, %c0_7] : memref<128x128xf32, #tpu.memory_space<vmem>>, vector<128x128xf32>
    tpu.vector_store %arg4[%c0_6, %c0_7], %7 {strides = array<i32>} : memref<128x128xf32, #tpu.memory_space<vmem>>, vector<128x128xf32>,
    return
  }
  func.func @transform_0(%arg0: i32) -> (i32, i32) {
    %c0_i32 = arith.constant 0 : i32
    %c0_i32_0 = arith.constant 0 : i32
    return %arg0, %c0_i32 : i32, i32
  }
  func.func @transform_1(%arg0: i32) -> (i32, i32) {
    %c0_i32 = arith.constant 0 : i32
    %c0_i32_0 = arith.constant 0 : i32
    %c0_i32_1 = arith.constant 0 : i32
    return %c0_i32, %c0_i32_0 : i32, i32
  }
  func.func @transform_2(%arg0: i32) -> (i32, i32) {
    %c0_i32 = arith.constant 0 : i32
    %c0_i32_0 = arith.constant 0 : i32
    %c0_i32_1 = arith.constant 0 : i32
    return %c0_i32, %c0_i32_0 : i32, i32
  }
  func.func @transform_3(%arg0: i32) -> (i32, i32) {
    %c0_i32 = arith.constant 0 : i32
    %c0_i32_0 = arith.constant 0 : i32
    return %arg0, %c0_i32 : i32, i32
  }
}

module attributes {stable_mosaic.version = 11 : i64} {
  func.func @_mm_bias_kernel(%arg0: i32, %arg1: memref<128x288xbf16, #tpu.memory_space<vmem>>, %arg2: memref<288x128xbf16, #tpu.memory_space<vmem>>, %arg3: memref<1x128xf32, #tpu.memory_space<vmem>>, %arg4: memref<128x128xf32, #tpu.memory_space<vmem>>) attributes {dimension_semantics = [#tpu.dimension_semantics<parallel>], iteration_bounds = array<i64: 1>, scalar_prefetch = 0 : i64, scratch_operands = 0 : i64, tpu.core_type = #tpu.core_type<tc>, window_params = [{transform_indices = @transform_0, window_bounds = array<i64: 128, 288>}, {pipeline_mode = #tpu.pipeline_mode<synchronous>, transform_indices = @transform_1, window_bounds = array<i64: 288, 128>}, {pipeline_mode = #tpu.pipeline_mode<synchronous>, transform_indices = @transform_2, window_bounds = array<i64: 1, 128>}, {transform_indices = @transform_3, window_bounds = array<i64: 128, 128>}]} {
    %c0 = arith.constant 0 : index
    %c0_0 = arith.constant 0 : index
    %0 = vector.load %arg1[%c0, %c0_0] : memref<128x288xbf16, #tpu.memory_space<vmem>>, vector<128x288xbf16>
    %c0_1 = arith.constant 0 : index
    %c0_2 = arith.constant 0 : index
    %1 = vector.load %arg2[%c0_1, %c0_2] : memref<288x128xbf16, #tpu.memory_space<vmem>>, vector<288x128xbf16>
    %cst = arith.constant dense<0.000000e+00> : vector<128x128xf32>
    %2 = tpu.matmul %0, %1, %cst {dimension_numbers = #tpu.dot_dimension_numbers<[1], [0], [0], [1], [0, 0, 1, 1], [], []>} : vector<128x288xbf16>, vector<288x128xbf16>, vector<128x128xf32> -> vector<128x128xf32>
    %c0_3 = arith.constant 0 : index
    %c0_4 = arith.constant 0 : index
    %3 = vector.load %arg3[%c0_3, %c0_4] : memref<1x128xf32, #tpu.memory_space<vmem>>, vector<1x128xf32>
    %4 = vector.broadcast %3 : vector<1x128xf32> to vector<128x128xf32>
    %5 = arith.addf %2, %4 : vector<128x128xf32>
    %cst_5 = arith.constant 0.000000e+00 : f32
    %6 = vector.broadcast %cst_5 : f32 to vector<128x128xf32>
    %7 = arith.maximumf %5, %6 : vector<128x128xf32>
    %c0_6 = arith.constant 0 : index
    %c0_7 = arith.constant 0 : index
    %8 = vector.load %arg4[%c0_6, %c0_7] : memref<128x128xf32, #tpu.memory_space<vmem>>, vector<128x128xf32>
    tpu.vector_store %arg4[%c0_6, %c0_7], %7 {strides = array<i32>} : memref<128x128xf32, #tpu.memory_space<vmem>>, vector<128x128xf32>,
    return
  }
  func.func @transform_0(%arg0: i32) -> (i32, i32) {
    %c0_i32 = arith.constant 0 : i32
    %c0_i32_0 = arith.constant 0 : i32
    return %arg0, %c0_i32 : i32, i32
  }
  func.func @transform_1(%arg0: i32) -> (i32, i32) {
    %c0_i32 = arith.constant 0 : i32
    %c0_i32_0 = arith.constant 0 : i32
    %c0_i32_1 = arith.constant 0 : i32
    return %c0_i32, %c0_i32_0 : i32, i32
  }
  func.func @transform_2(%arg0: i32) -> (i32, i32) {
    %c0_i32 = arith.constant 0 : i32
    %c0_i32_0 = arith.constant 0 : i32
    %c0_i32_1 = arith.constant 0 : i32
    return %c0_i32, %c0_i32_0 : i32, i32
  }
  func.func @transform_3(%arg0: i32) -> (i32, i32) {
    %c0_i32 = arith.constant 0 : i32
    %c0_i32_0 = arith.constant 0 : i32
    return %arg0, %c0_i32 : i32, i32
  }
}

module attributes {stable_mosaic.version = 11 : i64} {
  func.func @_mm_bias_res_kernel(%arg0: i32, %arg1: memref<128x288xbf16, #tpu.memory_space<vmem>>, %arg2: memref<288x128xbf16, #tpu.memory_space<vmem>>, %arg3: memref<1x128xf32, #tpu.memory_space<vmem>>, %arg4: memref<128x128xf32, #tpu.memory_space<vmem>>, %arg5: memref<128x128xf32, #tpu.memory_space<vmem>>) attributes {dimension_semantics = [#tpu.dimension_semantics<parallel>], iteration_bounds = array<i64: 1>, scalar_prefetch = 0 : i64, scratch_operands = 0 : i64, tpu.core_type = #tpu.core_type<tc>, window_params = [{transform_indices = @transform_0, window_bounds = array<i64: 128, 288>}, {pipeline_mode = #tpu.pipeline_mode<synchronous>, transform_indices = @transform_1, window_bounds = array<i64: 288, 128>}, {pipeline_mode = #tpu.pipeline_mode<synchronous>, transform_indices = @transform_2, window_bounds = array<i64: 1, 128>}, {transform_indices = @transform_3, window_bounds = array<i64: 128, 128>}, {transform_indices = @transform_4, window_bounds = array<i64: 128, 128>}]} {
    %c0 = arith.constant 0 : index
    %c0_0 = arith.constant 0 : index
    %0 = vector.load %arg1[%c0, %c0_0] : memref<128x288xbf16, #tpu.memory_space<vmem>>, vector<128x288xbf16>
    %c0_1 = arith.constant 0 : index
    %c0_2 = arith.constant 0 : index
    %1 = vector.load %arg2[%c0_1, %c0_2] : memref<288x128xbf16, #tpu.memory_space<vmem>>, vector<288x128xbf16>
    %cst = arith.constant dense<0.000000e+00> : vector<128x128xf32>
    %2 = tpu.matmul %0, %1, %cst {dimension_numbers = #tpu.dot_dimension_numbers<[1], [0], [0], [1], [0, 0, 1, 1], [], []>} : vector<128x288xbf16>, vector<288x128xbf16>, vector<128x128xf32> -> vector<128x128xf32>
    %c0_3 = arith.constant 0 : index
    %c0_4 = arith.constant 0 : index
    %3 = vector.load %arg3[%c0_3, %c0_4] : memref<1x128xf32, #tpu.memory_space<vmem>>, vector<1x128xf32>
    %4 = vector.broadcast %3 : vector<1x128xf32> to vector<128x128xf32>
    %5 = arith.addf %2, %4 : vector<128x128xf32>
    %c0_5 = arith.constant 0 : index
    %c0_6 = arith.constant 0 : index
    %6 = vector.load %arg4[%c0_5, %c0_6] : memref<128x128xf32, #tpu.memory_space<vmem>>, vector<128x128xf32>
    %7 = arith.addf %5, %6 : vector<128x128xf32>
    %cst_7 = arith.constant 0.000000e+00 : f32
    %8 = vector.broadcast %cst_7 : f32 to vector<128x128xf32>
    %9 = arith.maximumf %7, %8 : vector<128x128xf32>
    %c0_8 = arith.constant 0 : index
    %c0_9 = arith.constant 0 : index
    %10 = vector.load %arg5[%c0_8, %c0_9] : memref<128x128xf32, #tpu.memory_space<vmem>>, vector<128x128xf32>
    tpu.vector_store %arg5[%c0_8, %c0_9], %9 {strides = array<i32>} : memref<128x128xf32, #tpu.memory_space<vmem>>, vector<128x128xf32>,
    return
  }
  func.func @transform_0(%arg0: i32) -> (i32, i32) {
    %c0_i32 = arith.constant 0 : i32
    %c0_i32_0 = arith.constant 0 : i32
    return %arg0, %c0_i32 : i32, i32
  }
  func.func @transform_1(%arg0: i32) -> (i32, i32) {
    %c0_i32 = arith.constant 0 : i32
    %c0_i32_0 = arith.constant 0 : i32
    %c0_i32_1 = arith.constant 0 : i32
    return %c0_i32, %c0_i32_0 : i32, i32
  }
  func.func @transform_2(%arg0: i32) -> (i32, i32) {
    %c0_i32 = arith.constant 0 : i32
    %c0_i32_0 = arith.constant 0 : i32
    %c0_i32_1 = arith.constant 0 : i32
    return %c0_i32, %c0_i32_0 : i32, i32
  }
  func.func @transform_3(%arg0: i32) -> (i32, i32) {
    %c0_i32 = arith.constant 0 : i32
    %c0_i32_0 = arith.constant 0 : i32
    return %arg0, %c0_i32 : i32, i32
  }
  func.func @transform_4(%arg0: i32) -> (i32, i32) {
    %c0_i32 = arith.constant 0 : i32
    %c0_i32_0 = arith.constant 0 : i32
    return %arg0, %c0_i32 : i32, i32
  }
}

module attributes {stable_mosaic.version = 11 : i64} {
  func.func @_mm_bias_kernel(%arg0: i32, %arg1: memref<8x2048xbf16, #tpu.memory_space<vmem>>, %arg2: memref<2048x128xbf16, #tpu.memory_space<vmem>>, %arg3: memref<1x128xf32, #tpu.memory_space<vmem>>, %arg4: memref<8x128xf32, #tpu.memory_space<vmem>>) attributes {dimension_semantics = [#tpu.dimension_semantics<parallel>], iteration_bounds = array<i64: 1>, scalar_prefetch = 0 : i64, scratch_operands = 0 : i64, tpu.core_type = #tpu.core_type<tc>, window_params = [{transform_indices = @transform_0, window_bounds = array<i64: 8, 2048>}, {pipeline_mode = #tpu.pipeline_mode<synchronous>, transform_indices = @transform_1, window_bounds = array<i64: 2048, 128>}, {pipeline_mode = #tpu.pipeline_mode<synchronous>, transform_indices = @transform_2, window_bounds = array<i64: 1, 128>}, {transform_indices = @transform_3, window_bounds = array<i64: 8, 128>}]} {
    %c0 = arith.constant 0 : index
    %c0_0 = arith.constant 0 : index
    %0 = vector.load %arg1[%c0, %c0_0] : memref<8x2048xbf16, #tpu.memory_space<vmem>>, vector<8x2048xbf16>
    %c0_1 = arith.constant 0 : index
    %c0_2 = arith.constant 0 : index
    %1 = vector.load %arg2[%c0_1, %c0_2] : memref<2048x128xbf16, #tpu.memory_space<vmem>>, vector<2048x128xbf16>
    %cst = arith.constant dense<0.000000e+00> : vector<8x128xf32>
    %2 = tpu.matmul %0, %1, %cst {dimension_numbers = #tpu.dot_dimension_numbers<[1], [0], [0], [1], [0, 0, 1, 1], [], []>} : vector<8x2048xbf16>, vector<2048x128xbf16>, vector<8x128xf32> -> vector<8x128xf32>
    %c0_3 = arith.constant 0 : index
    %c0_4 = arith.constant 0 : index
    %3 = vector.load %arg3[%c0_3, %c0_4] : memref<1x128xf32, #tpu.memory_space<vmem>>, vector<1x128xf32>
    %4 = vector.broadcast %3 : vector<1x128xf32> to vector<8x128xf32>
    %5 = arith.addf %2, %4 : vector<8x128xf32>
    %c0_5 = arith.constant 0 : index
    %c0_6 = arith.constant 0 : index
    %6 = vector.load %arg4[%c0_5, %c0_6] : memref<8x128xf32, #tpu.memory_space<vmem>>, vector<8x128xf32>
    tpu.vector_store %arg4[%c0_5, %c0_6], %5 {strides = array<i32>} : memref<8x128xf32, #tpu.memory_space<vmem>>, vector<8x128xf32>,
    return
  }
  func.func @transform_0(%arg0: i32) -> (i32, i32) {
    %c0_i32 = arith.constant 0 : i32
    %c0_i32_0 = arith.constant 0 : i32
    return %arg0, %c0_i32 : i32, i32
  }
  func.func @transform_1(%arg0: i32) -> (i32, i32) {
    %c0_i32 = arith.constant 0 : i32
    %c0_i32_0 = arith.constant 0 : i32
    %c0_i32_1 = arith.constant 0 : i32
    return %c0_i32, %c0_i32_0 : i32, i32
  }
  func.func @transform_2(%arg0: i32) -> (i32, i32) {
    %c0_i32 = arith.constant 0 : i32
    %c0_i32_0 = arith.constant 0 : i32
    %c0_i32_1 = arith.constant 0 : i32
    return %c0_i32, %c0_i32_0 : i32, i32
  }
  func.func @transform_3(%arg0: i32) -> (i32, i32) {
    %c0_i32 = arith.constant 0 : i32
    %c0_i32_0 = arith.constant 0 : i32
    return %arg0, %c0_i32 : i32, i32
  }
}

</mosaic_0001>

<llo_original>
// kernel: scalable_resnet_forward.4
$region0: #{scalable_resnet_forward.4}
  #allocation0 [shape = 'u32[]', space=smem, size = 0x4, offset = 0x4, fixed_abs, tag = 'smem constant byte address 0x4 - core index']
  #allocation1 [shape = 'u32[72,128]{1,0:T(1,128)}', space=vmem, size = 0x9000, scoped, tag = 'internal scratch']
  %s0 = inlined_call_operand.vmem [shape: bf16[128,32], index: 0, kind: input, shape index: {}]
  %s1 = inlined_call_operand.vmem [shape: bf16[32,128], index: 1, kind: input, shape index: {}]
  %s2 = inlined_call_operand.vmem [shape: f32[1,128], index: 2, kind: input, shape index: {}]
  %s3 = inlined_call_operand.vmem [shape: f32[128,128], index: 3, kind: output, shape index: {}]
  %s4 = sld [smem:[#allocation0]]
  $region22: #{scalable_resnet_forward.4} parent=0
    _
  %s6 = ssub.s32 1, %s4
  %s7 = scalar_select 0, %s6, %s4
  // Predicated region
  $region2: #{scalable_resnet_forward.4} parent=0 // pred_check
    _
  $region3: #{scalable_resnet_forward.4} parent=0 // pred_check_branch
    %9 = sbr.rel (0) target = $region5
  $region4: #{scalable_resnet_forward.4} parent=0 // pred_region
    _
  $region5: #{scalable_resnet_forward.4} parent=0 // pred_fallthru
    _
  // Predicated region
  $region6: #{scalable_resnet_forward.4} parent=0 // pred_check
    _
  $region7: #{scalable_resnet_forward.4} parent=0 // pred_check_branch
    %11 = sbr.rel (0) target = $region9
  $region8: #{scalable_resnet_forward.4} parent=0 // pred_region
    _
  $region9: #{scalable_resnet_forward.4} parent=0 // pred_fallthru
    _
  // Predicated region
  $region10: #{scalable_resnet_forward.4} parent=0 // pred_check
    _
  $region11: #{scalable_resnet_forward.4} parent=0 // pred_check_branch
    %13 = sbr.rel (0) target = $region13
  $region12: #{scalable_resnet_forward.4} parent=0 // pred_region
    _
  $region13: #{scalable_resnet_forward.4} parent=0 // pred_fallthru
    _
  %v15 = vld [vmem:[%s0] sm:$0xf]
  %v16 = vld [vmem:[%s0 + $0x4] sm:$0xf]
  %v17 = vld [vmem:[%s0 + $0x8] sm:$0xf]
  %v18 = vld [vmem:[%s0 + $0xc] sm:$0xf]
  %v19 = vld [vmem:[%s0 + $0x10] sm:$0xf]
  %v20 = vld [vmem:[%s0 + $0x14] sm:$0xf]
  %v21 = vld [vmem:[%s0 + $0x18] sm:$0xf]
  %v22 = vld [vmem:[%s0 + $0x1c] sm:$0xf]
  %v23 = vld [vmem:[%s0 + $0x20] sm:$0xf]
  %v24 = vld [vmem:[%s0 + $0x24] sm:$0xf]
  %v25 = vld [vmem:[%s0 + $0x28] sm:$0xf]
  %v26 = vld [vmem:[%s0 + $0x2c] sm:$0xf]
  %v27 = vld [vmem:[%s0 + $0x30] sm:$0xf]
  %v28 = vld [vmem:[%s0 + $0x34] sm:$0xf]
  %v29 = vld [vmem:[%s0 + $0x38] sm:$0xf]
  %v30 = vld [vmem:[%s0 + $0x3c] sm:$0xf]
  %v31 = vld [vmem:[%s1] sm:$0xf]
  %v32 = vld [vmem:[%s1 + $0x4] sm:$0xf]
  %v33 = vld [vmem:[%s1 + $0x8] sm:$0xf]
  %v34 = vld [vmem:[%s1 + $0xc] sm:$0xf]
  %v35 = vld [vmem:[%s2] sm:$0x1]
  %v37 = vperm.slane %v35, 0
  %v55 = vunpack.c.l.b16 %v15
  %v56 = vunpack.c.l.b16 %v16
  %v57 = vunpack.c.l.b16 %v17
  %v58 = vunpack.c.l.b16 %v18
  %v59 = vunpack.c.l.b16 %v19
  %v60 = vunpack.c.l.b16 %v20
  %v61 = vunpack.c.l.b16 %v21
  %v62 = vunpack.c.l.b16 %v22
  %v63 = vunpack.c.l.b16 %v23
  %v64 = vunpack.c.l.b16 %v24
  %v65 = vunpack.c.l.b16 %v25
  %v66 = vunpack.c.l.b16 %v26
  %v67 = vunpack.c.l.b16 %v27
  %v68 = vunpack.c.l.b16 %v28
  %v69 = vunpack.c.l.b16 %v29
  %v70 = vunpack.c.l.b16 %v30
  %v71 = vpack.c.b16 %v56, %v55
  %v72 = vpack.c.b16 %v58, %v57
  %v73 = vpack.c.b16 %v60, %v59
  %v74 = vpack.c.b16 %v62, %v61
  %v75 = vpack.c.b16 %v64, %v63
  %v76 = vpack.c.b16 %v66, %v65
  %v77 = vpack.c.b16 %v68, %v67
  %v78 = vpack.c.b16 %v70, %v69
  %v83 = vunpack.c.l.b16 %v31
  %v84 = vunpack.c.l.b16 %v32
  %v85 = vunpack.c.l.b16 %v33
  %v86 = vunpack.c.l.b16 %v34
  %v87 = vpack.c.b16 %v84, %v83
  %v88 = vpack.c.b16 %v86, %v85
  %vm91 = vcmask 261120
  %v93 = vsel %vm91, %v71, 0
  %v96 = vsel %vm91, %v72, 0
  %v99 = vsel %vm91, %v73, 0
  %v102 = vsel %vm91, %v74, 0
  %v105 = vsel %vm91, %v75, 0
  %v108 = vsel %vm91, %v76, 0
  %v111 = vsel %vm91, %v77, 0
  %v114 = vsel %vm91, %v78, 0
  %116 = vmatpush.bf16.msra.mxu0 0
  %117 = vmatpush.bf16.msra.mxu0 0
  %118 = vmatpush.bf16.msra.mxu0 0
  %119 = vmatpush.bf16.msra.mxu0 0
  %120 = vmatpush.bf16.msra.mxu0 0
  %121 = vmatpush.bf16.msra.mxu0 0
  %122 = vmatpush.bf16.msra.mxu0 %v88
  %123 = vmatpush.bf16.msra.mxu0 %v87
  %124 = vmatmul.bf16.gmra.mxu0 %v93
  %v125 = vpop.f32.mrf.mxu0
  %v126 = vadd.f32 %v37, %v125
  %v127 = vpop.f32.mrf.mxu0
  %v128 = vadd.f32 %v37, %v127
  %129 = vmatmul.bf16.gmra.mxu0 %v96
  %v130 = vpop.f32.mrf.mxu0
  %v131 = vadd.f32 %v37, %v130
  %v132 = vpop.f32.mrf.mxu0
  %v133 = vadd.f32 %v37, %v132
  %134 = vmatmul.bf16.gmra.mxu0 %v99
  %v135 = vpop.f32.mrf.mxu0
  %v136 = vadd.f32 %v37, %v135
  %v137 = vpop.f32.mrf.mxu0
  %v138 = vadd.f32 %v37, %v137
  %139 = vmatmul.bf16.gmra.mxu0 %v102
  %v140 = vpop.f32.mrf.mxu0
  %v141 = vadd.f32 %v37, %v140
  %v142 = vpop.f32.mrf.mxu0
  %v143 = vadd.f32 %v37, %v142
  %144 = vmatmul.bf16.gmra.mxu0 %v105
  %v145 = vpop.f32.mrf.mxu0
  %v146 = vadd.f32 %v37, %v145
  %v147 = vpop.f32.mrf.mxu0
  %v148 = vadd.f32 %v37, %v147
  %149 = vmatmul.bf16.gmra.mxu0 %v108
  %v150 = vpop.f32.mrf.mxu0
  %v151 = vadd.f32 %v37, %v150
  %v152 = vpop.f32.mrf.mxu0
  %v153 = vadd.f32 %v37, %v152
  %154 = vmatmul.bf16.gmra.mxu0 %v111
  %v155 = vpop.f32.mrf.mxu0
  %v156 = vadd.f32 %v37, %v155
  %v157 = vpop.f32.mrf.mxu0
  %v158 = vadd.f32 %v37, %v157
  %159 = vmatmul.bf16.gmra.mxu0 %v114
  %v160 = vpop.f32.mrf.mxu0
  %v161 = vadd.f32 %v37, %v160
  %v162 = vpop.f32.mrf.mxu0
  %v163 = vadd.f32 %v37, %v162
  %164 = vdwg.mxu0
  %v165 = vmax.f32 %v126, 0.0
  %v166 = vmax.f32 %v128, 0.0
  %v167 = vmax.f32 %v131, 0.0
  %v168 = vmax.f32 %v133, 0.0
  %v169 = vmax.f32 %v136, 0.0
  %v170 = vmax.f32 %v138, 0.0
  %v171 = vmax.f32 %v141, 0.0
  %v172 = vmax.f32 %v143, 0.0
  %v173 = vmax.f32 %v146, 0.0
  %v174 = vmax.f32 %v148, 0.0
  %v175 = vmax.f32 %v151, 0.0
  %v176 = vmax.f32 %v153, 0.0
  %v177 = vmax.f32 %v156, 0.0
  %v178 = vmax.f32 %v158, 0.0
  %v179 = vmax.f32 %v161, 0.0
  %v180 = vmax.f32 %v163, 0.0
  %181 = vst [vmem:[%s3] sm:$0xff] %v165
  %182 = vst [vmem:[%s3 + $0x8] sm:$0xff] %v166
  %183 = vst [vmem:[%s3 + $0x10] sm:$0xff] %v167
  %184 = vst [vmem:[%s3 + $0x18] sm:$0xff] %v168
  %185 = vst [vmem:[%s3 + $0x20] sm:$0xff] %v169
  %186 = vst [vmem:[%s3 + $0x28] sm:$0xff] %v170
  %187 = vst [vmem:[%s3 + $0x30] sm:$0xff] %v171
  %188 = vst [vmem:[%s3 + $0x38] sm:$0xff] %v172
  %189 = vst [vmem:[%s3 + $0x40] sm:$0xff] %v173
  %190 = vst [vmem:[%s3 + $0x48] sm:$0xff] %v174
  %191 = vst [vmem:[%s3 + $0x50] sm:$0xff] %v175
  %192 = vst [vmem:[%s3 + $0x58] sm:$0xff] %v176
  %193 = vst [vmem:[%s3 + $0x60] sm:$0xff] %v177
  %194 = vst [vmem:[%s3 + $0x68] sm:$0xff] %v178
  %195 = vst [vmem:[%s3 + $0x70] sm:$0xff] %v179
  %196 = vst [vmem:[%s3 + $0x78] sm:$0xff] %v180
  // Predicated region
  $region14: #{scalable_resnet_forward.4} parent=0 // pred_check
    _
  $region15: #{scalable_resnet_forward.4} parent=0 // pred_check_branch
    %198 = sbr.rel (0) target = $region17
  $region16: #{scalable_resnet_forward.4} parent=0 // pred_region
    _
  $region17: #{scalable_resnet_forward.4} parent=0 // pred_fallthru
    _
  // Predicated region
  $region18: #{scalable_resnet_forward.4} parent=0 // pred_check
    _
  $region19: #{scalable_resnet_forward.4} parent=0 // pred_check_branch
    %200 = sbr.rel (0) target = $region21
  $region20: #{scalable_resnet_forward.4} parent=0 // pred_region
    _
  $region21: #{scalable_resnet_forward.4} parent=0 // pred_fallthru
    _

// kernel: scalable_resnet_forward.5
$region0: #{scalable_resnet_forward.5}
  #allocation0 [shape = 'u32[]', space=smem, size = 0x4, offset = 0x4, fixed_abs, tag = 'smem constant byte address 0x4 - core index']
  #allocation1 [shape = 'u32[72,128]{1,0:T(1,128)}', space=vmem, size = 0x9000, scoped, tag = 'internal scratch']
  %s0 = inlined_call_operand.vmem [shape: bf16[128,288], index: 0, kind: input, shape index: {}]
  %s1 = inlined_call_operand.vmem [shape: bf16[288,128], index: 1, kind: input, shape index: {}]
  %s2 = inlined_call_operand.vmem [shape: f32[1,128], index: 2, kind: input, shape index: {}]
  %s3 = inlined_call_operand.vmem [shape: f32[128,128], index: 3, kind: output, shape index: {}]
  %s4 = sld [smem:[#allocation0]]
  $region22: #{scalable_resnet_forward.5} parent=0
    _
  %s6 = ssub.s32 1, %s4
  %s7 = scalar_select 0, %s6, %s4
  // Predicated region
  $region2: #{scalable_resnet_forward.5} parent=0 // pred_check
    _
  $region3: #{scalable_resnet_forward.5} parent=0 // pred_check_branch
    %9 = sbr.rel (0) target = $region5
  $region4: #{scalable_resnet_forward.5} parent=0 // pred_region
    _
  $region5: #{scalable_resnet_forward.5} parent=0 // pred_fallthru
    _
  // Predicated region
  $region6: #{scalable_resnet_forward.5} parent=0 // pred_check
    _
  $region7: #{scalable_resnet_forward.5} parent=0 // pred_check_branch
    %11 = sbr.rel (0) target = $region9
  $region8: #{scalable_resnet_forward.5} parent=0 // pred_region
    _
  $region9: #{scalable_resnet_forward.5} parent=0 // pred_fallthru
    _
  // Predicated region
  $region10: #{scalable_resnet_forward.5} parent=0 // pred_check
    _
  $region11: #{scalable_resnet_forward.5} parent=0 // pred_check_branch
    %13 = sbr.rel (0) target = $region13
  $region12: #{scalable_resnet_forward.5} parent=0 // pred_region
    _
  $region13: #{scalable_resnet_forward.5} parent=0 // pred_fallthru
    _
  %v15 = vld [vmem:[%s0] sm:$0xff]
  %v16 = vld [vmem:[%s0 + $0x8] sm:$0xf]
  %v17 = vld [vmem:[%s0 + $0xc] sm:$0xff]
  %v18 = vld [vmem:[%s0 + $0x14] sm:$0xf]
  %v19 = vld [vmem:[%s0 + $0x18] sm:$0xff]
  %v20 = vld [vmem:[%s0 + $0x20] sm:$0xf]
  %v21 = vld [vmem:[%s0 + $0x24] sm:$0xff]
  %v22 = vld [vmem:[%s0 + $0x2c] sm:$0xf]
  %v23 = vld [vmem:[%s0 + $0x30] sm:$0xff]
  %v24 = vld [vmem:[%s0 + $0x38] sm:$0xf]
  %v25 = vld [vmem:[%s0 + $0x3c] sm:$0xff]
  %v26 = vld [vmem:[%s0 + $0x44] sm:$0xf]
  %v27 = vld [vmem:[%s0 + $0x48] sm:$0xff]
  %v28 = vld [vmem:[%s0 + $0x50] sm:$0xf]
  %v29 = vld [vmem:[%s0 + $0x54] sm:$0xff]
  %v30 = vld [vmem:[%s0 + $0x5c] sm:$0xf]
  %v31 = vld [vmem:[%s0 + $0x60] sm:$0xff]
  %v32 = vld [vmem:[%s0 + $0x68] sm:$0xf]
  %v33 = vld [vmem:[%s0 + $0x6c] sm:$0xff]
  %v34 = vld [vmem:[%s0 + $0x74] sm:$0xf]
  %v35 = vld [vmem:[%s0 + $0x78] sm:$0xff]
  %v36 = vld [vmem:[%s0 + $0x80] sm:$0xf]
  %v37 = vld [vmem:[%s0 + $0x84] sm:$0xff]
  %v38 = vld [vmem:[%s0 + $0x8c] sm:$0xf]
  %v39 = vld [vmem:[%s0 + $0x90] sm:$0xff]
  %v40 = vld [vmem:[%s0 + $0x98] sm:$0xf]
  %v41 = vld [vmem:[%s0 + $0x9c] sm:$0xff]
  %v42 = vld [vmem:[%s0 + $0xa4] sm:$0xf]
  %v43 = vld [vmem:[%s0 + $0xa8] sm:$0xff]
  %v44 = vld [vmem:[%s0 + $0xb0] sm:$0xf]
  %v45 = vld [vmem:[%s0 + $0xb4] sm:$0xff]
  %v46 = vld [vmem:[%s0 + $0xbc] sm:$0xf]
  %v47 = vld [vmem:[%s1] sm:$0xf]
  %v48 = vld [vmem:[%s1 + $0x4] sm:$0xf]
  %v49 = vld [vmem:[%s1 + $0x8] sm:$0xf]
  %v50 = vld [vmem:[%s1 + $0xc] sm:$0xf]
  %v51 = vld [vmem:[%s1 + $0x10] sm:$0xf]
  %v52 = vld [vmem:[%s1 + $0x14] sm:$0xf]
  %v53 = vld [vmem:[%s1 + $0x18] sm:$0xf]
  %v54 = vld [vmem:[%s1 + $0x1c] sm:$0xf]
  %v55 = vld [vmem:[%s1 + $0x20] sm:$0xf]
  %v56 = vld [vmem:[%s1 + $0x24] sm:$0xf]
  %v57 = vld [vmem:[%s1 + $0x28] sm:$0xf]
  %v58 = vld [vmem:[%s1 + $0x2c] sm:$0xf]
  %v59 = vld [vmem:[%s1 + $0x30] sm:$0xf]
  %v60 = vld [vmem:[%s1 + $0x34] sm:$0xf]
  %v61 = vld [vmem:[%s1 + $0x38] sm:$0xf]
  %v62 = vld [vmem:[%s1 + $0x3c] sm:$0xf]
  %v63 = vld [vmem:[%s1 + $0x40] sm:$0xf]
  %v64 = vld [vmem:[%s1 + $0x44] sm:$0xf]
  %v65 = vld [vmem:[%s1 + $0x48] sm:$0xf]
  %v66 = vld [vmem:[%s1 + $0x4c] sm:$0xf]
  %v67 = vld [vmem:[%s1 + $0x50] sm:$0xf]
  %v68 = vld [vmem:[%s1 + $0x54] sm:$0xf]
  %v69 = vld [vmem:[%s1 + $0x58] sm:$0xf]
  %v70 = vld [vmem:[%s1 + $0x5c] sm:$0xf]
  %v71 = vld [vmem:[%s1 + $0x60] sm:$0xf]
  %v72 = vld [vmem:[%s1 + $0x64] sm:$0xf]
  %v73 = vld [vmem:[%s1 + $0x68] sm:$0xf]
  %v74 = vld [vmem:[%s1 + $0x6c] sm:$0xf]
  %v75 = vld [vmem:[%s1 + $0x70] sm:$0xf]
  %v76 = vld [vmem:[%s1 + $0x74] sm:$0xf]
  %v77 = vld [vmem:[%s1 + $0x78] sm:$0xf]
  %v78 = vld [vmem:[%s1 + $0x7c] sm:$0xf]
  %v79 = vld [vmem:[%s1 + $0x80] sm:$0xf]
  %v80 = vld [vmem:[%s1 + $0x84] sm:$0xf]
  %v81 = vld [vmem:[%s1 + $0x88] sm:$0xf]
  %v82 = vld [vmem:[%s1 + $0x8c] sm:$0xf]
  %v83 = vld [vmem:[%s2] sm:$0x1]
  %v85 = vperm.slane %v83, 0
  %v119 = vunpack.c.l.b16 %v15
  %v120 = vunpack.c.h.b16 %v15
  %v121 = vunpack.c.l.b16 %v16
  %v122 = vunpack.c.l.b16 %v17
  %v123 = vunpack.c.h.b16 %v17
  %v124 = vunpack.c.l.b16 %v18
  %v125 = vunpack.c.l.b16 %v19
  %v126 = vunpack.c.h.b16 %v19
  %v127 = vunpack.c.l.b16 %v20
  %v128 = vunpack.c.l.b16 %v21
  %v129 = vunpack.c.h.b16 %v21
  %v130 = vunpack.c.l.b16 %v22
  %v131 = vunpack.c.l.b16 %v23
  %v132 = vunpack.c.h.b16 %v23
  %v133 = vunpack.c.l.b16 %v24
  %v134 = vunpack.c.l.b16 %v25
  %v135 = vunpack.c.h.b16 %v25
  %v136 = vunpack.c.l.b16 %v26
  %v137 = vunpack.c.l.b16 %v27
  %v138 = vunpack.c.h.b16 %v27
  %v139 = vunpack.c.l.b16 %v28
  %v140 = vunpack.c.l.b16 %v29
  %v141 = vunpack.c.h.b16 %v29
  %v142 = vunpack.c.l.b16 %v30
  %v143 = vunpack.c.l.b16 %v31
  %v144 = vunpack.c.h.b16 %v31
  %v145 = vunpack.c.l.b16 %v32
  %v146 = vunpack.c.l.b16 %v33
  %v147 = vunpack.c.h.b16 %v33
  %v148 = vunpack.c.l.b16 %v34
  %v149 = vunpack.c.l.b16 %v35
  %v150 = vunpack.c.h.b16 %v35
  %v151 = vunpack.c.l.b16 %v36
  %v152 = vunpack.c.l.b16 %v37
  %v153 = vunpack.c.h.b16 %v37
  %v154 = vunpack.c.l.b16 %v38
  %v155 = vunpack.c.l.b16 %v39
  %v156 = vunpack.c.h.b16 %v39
  %v157 = vunpack.c.l.b16 %v40
  %v158 = vunpack.c.l.b16 %v41
  %v159 = vunpack.c.h.b16 %v41
  %v160 = vunpack.c.l.b16 %v42
  %v161 = vunpack.c.l.b16 %v43
  %v162 = vunpack.c.h.b16 %v43
  %v163 = vunpack.c.l.b16 %v44
  %v164 = vunpack.c.l.b16 %v45
  %v165 = vunpack.c.h.b16 %v45
  %v166 = vunpack.c.l.b16 %v46
  %v167 = vpack.c.b16 %v122, %v119
  %v168 = vpack.c.b16 %v123, %v120
  %v169 = vpack.c.b16 %v124, %v121
  %v170 = vpack.c.b16 %v128, %v125
  %v171 = vpack.c.b16 %v129, %v126
  %v172 = vpack.c.b16 %v130, %v127
  %v173 = vpack.c.b16 %v134, %v131
  %v174 = vpack.c.b16 %v135, %v132
  %v175 = vpack.c.b16 %v136, %v133
  %v176 = vpack.c.b16 %v140, %v137
  %v177 = vpack.c.b16 %v141, %v138
  %v178 = vpack.c.b16 %v142, %v139
  %v179 = vpack.c.b16 %v146, %v143
  %v180 = vpack.c.b16 %v147, %v144
  %v181 = vpack.c.b16 %v148, %v145
  %v182 = vpack.c.b16 %v152, %v149
  %v183 = vpack.c.b16 %v153, %v150
  %v184 = vpack.c.b16 %v154, %v151
  %v185 = vpack.c.b16 %v158, %v155
  %v186 = vpack.c.b16 %v159, %v156
  %v187 = vpack.c.b16 %v160, %v157
  %v188 = vpack.c.b16 %v164, %v161
  %v189 = vpack.c.b16 %v165, %v162
  %v190 = vpack.c.b16 %v166, %v163
  %v243 = vunpack.c.l.b16 %v47
  %v244 = vunpack.c.l.b16 %v48
  %v245 = vunpack.c.l.b16 %v49
  %v246 = vunpack.c.l.b16 %v50
  %v247 = vunpack.c.l.b16 %v51
  %v248 = vunpack.c.l.b16 %v52
  %v249 = vunpack.c.l.b16 %v53
  %v250 = vunpack.c.l.b16 %v54
  %v251 = vunpack.c.l.b16 %v55
  %v252 = vunpack.c.l.b16 %v56
  %v253 = vunpack.c.l.b16 %v57
  %v254 = vunpack.c.l.b16 %v58
  %v255 = vunpack.c.l.b16 %v59
  %v256 = vunpack.c.l.b16 %v60
  %v257 = vunpack.c.l.b16 %v61
  %v258 = vunpack.c.l.b16 %v62
  %v259 = vunpack.c.l.b16 %v63
  %v260 = vunpack.c.l.b16 %v64
  %v261 = vunpack.c.l.b16 %v65
  %v262 = vunpack.c.l.b16 %v66
  %v263 = vunpack.c.l.b16 %v67
  %v264 = vunpack.c.l.b16 %v68
  %v265 = vunpack.c.l.b16 %v69
  %v266 = vunpack.c.l.b16 %v70
  %v267 = vunpack.c.l.b16 %v71
  %v268 = vunpack.c.l.b16 %v72
  %v269 = vunpack.c.l.b16 %v73
  %v270 = vunpack.c.l.b16 %v74
  %v271 = vunpack.c.l.b16 %v75
  %v272 = vunpack.c.l.b16 %v76
  %v273 = vunpack.c.l.b16 %v77
  %v274 = vunpack.c.l.b16 %v78
  %v275 = vunpack.c.l.b16 %v79
  %v276 = vunpack.c.l.b16 %v80
  %v277 = vunpack.c.l.b16 %v81
  %v278 = vunpack.c.l.b16 %v82
  %v279 = vpack.c.b16 %v244, %v243
  %v280 = vpack.c.b16 %v246, %v245
  %v281 = vpack.c.b16 %v248, %v247
  %v282 = vpack.c.b16 %v250, %v249
  %v283 = vpack.c.b16 %v252, %v251
  %v284 = vpack.c.b16 %v254, %v253
  %v285 = vpack.c.b16 %v256, %v255
  %v286 = vpack.c.b16 %v258, %v257
  %v287 = vpack.c.b16 %v260, %v259
  %v288 = vpack.c.b16 %v262, %v261
  %v289 = vpack.c.b16 %v264, %v263
  %v290 = vpack.c.b16 %v266, %v265
  %v291 = vpack.c.b16 %v268, %v267
  %v292 = vpack.c.b16 %v270, %v269
  %v293 = vpack.c.b16 %v272, %v271
  %v294 = vpack.c.b16 %v274, %v273
  %v295 = vpack.c.b16 %v276, %v275
  %v296 = vpack.c.b16 %v278, %v277
  %vm315 = vcmask 261120
  %v317 = vsel %vm315, %v169, 0
  %v320 = vsel %vm315, %v172, 0
  %v323 = vsel %vm315, %v175, 0
  %v326 = vsel %vm315, %v178, 0
  %v329 = vsel %vm315, %v181, 0
  %v332 = vsel %vm315, %v184, 0
  %v335 = vsel %vm315, %v187, 0
  %v338 = vsel %vm315, %v190, 0
  %340 = vmatpush.bf16.msra.mxu0 %v286
  %341 = vmatpush.bf16.msra.mxu0 %v285
  %342 = vmatpush.bf16.msra.mxu0 %v284
  %343 = vmatpush.bf16.msra.mxu0 %v283
  %344 = vmatpush.bf16.msra.mxu0 %v282
  %345 = vmatpush.bf16.msra.mxu0 %v281
  %346 = vmatpush.bf16.msra.mxu0 %v280
  %347 = vmatpush.bf16.msra.mxu0 %v279
  %348 = vmatmul.bf16.gmra.mxu0 %v167
  %v349 = vpop.f32.mrf.mxu0
  %v350 = vadd.f32 %v85, %v349
  %v351 = vpop.f32.mrf.mxu0
  %v352 = vadd.f32 %v85, %v351
  %353 = vmatmul.bf16.gmra.mxu0 %v170
  %v354 = vpop.f32.mrf.mxu0
  %v355 = vadd.f32 %v85, %v354
  %v356 = vpop.f32.mrf.mxu0
  %v357 = vadd.f32 %v85, %v356
  %358 = vmatmul.bf16.gmra.mxu0 %v173
  %v359 = vpop.f32.mrf.mxu0
  %v360 = vadd.f32 %v85, %v359
  %v361 = vpop.f32.mrf.mxu0
  %v362 = vadd.f32 %v85, %v361
  %363 = vmatmul.bf16.gmra.mxu0 %v176
  %v364 = vpop.f32.mrf.mxu0
  %v365 = vadd.f32 %v85, %v364
  %v366 = vpop.f32.mrf.mxu0
  %v367 = vadd.f32 %v85, %v366
  %368 = vmatmul.bf16.gmra.mxu0 %v179
  %v369 = vpop.f32.mrf.mxu0
  %v370 = vadd.f32 %v85, %v369
  %v371 = vpop.f32.mrf.mxu0
  %v372 = vadd.f32 %v85, %v371
  %373 = vmatmul.bf16.gmra.mxu0 %v182
  %v374 = vpop.f32.mrf.mxu0
  %v375 = vadd.f32 %v85, %v374
  %v376 = vpop.f32.mrf.mxu0
  %v377 = vadd.f32 %v85, %v376
  %378 = vmatmul.bf16.gmra.mxu0 %v185
  %v379 = vpop.f32.mrf.mxu0
  %v380 = vadd.f32 %v85, %v379
  %v381 = vpop.f32.mrf.mxu0
  %v382 = vadd.f32 %v85, %v381
  %383 = vmatmul.bf16.gmra.mxu0 %v188
  %v384 = vpop.f32.mrf.mxu0
  %v385 = vadd.f32 %v85, %v384
  %v386 = vpop.f32.mrf.mxu0
  %v387 = vadd.f32 %v85, %v386
  %388 = vdwg.mxu0
  %389 = vmatpush.bf16.msra.mxu0 %v294
  %390 = vmatpush.bf16.msra.mxu0 %v293
  %391 = vmatpush.bf16.msra.mxu0 %v292
  %392 = vmatpush.bf16.msra.mxu0 %v291
  %393 = vmatpush.bf16.msra.mxu0 %v290
  %394 = vmatpush.bf16.msra.mxu0 %v289
  %395 = vmatpush.bf16.msra.mxu0 %v288
  %396 = vmatpush.bf16.msra.mxu0 %v287
  %397 = vmatmul.bf16.gmra.mxu0 %v168
  %v398 = vpop.f32.mrf.mxu0
  %v399 = vadd.f32 %v350, %v398
  %v400 = vpop.f32.mrf.mxu0
  %v401 = vadd.f32 %v352, %v400
  %402 = vmatmul.bf16.gmra.mxu0 %v171
  %v403 = vpop.f32.mrf.mxu0
  %v404 = vadd.f32 %v355, %v403
  %v405 = vpop.f32.mrf.mxu0
  %v406 = vadd.f32 %v357, %v405
  %407 = vmatmul.bf16.gmra.mxu0 %v174
  %v408 = vpop.f32.mrf.mxu0
  %v409 = vadd.f32 %v360, %v408
  %v410 = vpop.f32.mrf.mxu0
  %v411 = vadd.f32 %v362, %v410
  %412 = vmatmul.bf16.gmra.mxu0 %v177
  %v413 = vpop.f32.mrf.mxu0
  %v414 = vadd.f32 %v365, %v413
  %v415 = vpop.f32.mrf.mxu0
  %v416 = vadd.f32 %v367, %v415
  %417 = vmatmul.bf16.gmra.mxu0 %v180
  %v418 = vpop.f32.mrf.mxu0
  %v419 = vadd.f32 %v370, %v418
  %v420 = vpop.f32.mrf.mxu0
  %v421 = vadd.f32 %v372, %v420
  %422 = vmatmul.bf16.gmra.mxu0 %v183
  %v423 = vpop.f32.mrf.mxu0
  %v424 = vadd.f32 %v375, %v423
  %v425 = vpop.f32.mrf.mxu0
  %v426 = vadd.f32 %v377, %v425
  %427 = vmatmul.bf16.gmra.mxu0 %v186
  %v428 = vpop.f32.mrf.mxu0
  %v429 = vadd.f32 %v380, %v428
  %v430 = vpop.f32.mrf.mxu0
  %v431 = vadd.f32 %v382, %v430
  %432 = vmatmul.bf16.gmra.mxu0 %v189
  %v433 = vpop.f32.mrf.mxu0
  %v434 = vadd.f32 %v385, %v433
  %v435 = vpop.f32.mrf.mxu0
  %v436 = vadd.f32 %v387, %v435
  %437 = vdwg.mxu0
  %438 = vmatpush.bf16.msra.mxu0 0
  %439 = vmatpush.bf16.msra.mxu0 0
  %440 = vmatpush.bf16.msra.mxu0 0
  %441 = vmatpush.bf16.msra.mxu0 0
  %442 = vmatpush.bf16.msra.mxu0 0
  %443 = vmatpush.bf16.msra.mxu0 0
  %444 = vmatpush.bf16.msra.mxu0 %v296
  %445 = vmatpush.bf16.msra.mxu0 %v295
  %446 = vmatmul.bf16.gmra.mxu0 %v317
  %v447 = vpop.f32.mrf.mxu0
  %v448 = vadd.f32 %v399, %v447
  %v449 = vpop.f32.mrf.mxu0
  %v450 = vadd.f32 %v401, %v449
  %451 = vmatmul.bf16.gmra.mxu0 %v320
  %v452 = vpop.f32.mrf.mxu0
  %v453 = vadd.f32 %v404, %v452
  %v454 = vpop.f32.mrf.mxu0
  %v455 = vadd.f32 %v406, %v454
  %456 = vmatmul.bf16.gmra.mxu0 %v323
  %v457 = vpop.f32.mrf.mxu0
  %v458 = vadd.f32 %v409, %v457
  %v459 = vpop.f32.mrf.mxu0
  %v460 = vadd.f32 %v411, %v459
  %461 = vmatmul.bf16.gmra.mxu0 %v326
  %v462 = vpop.f32.mrf.mxu0
  %v463 = vadd.f32 %v414, %v462
  %v464 = vpop.f32.mrf.mxu0
  %v465 = vadd.f32 %v416, %v464
  %466 = vmatmul.bf16.gmra.mxu0 %v329
  %v467 = vpop.f32.mrf.mxu0
  %v468 = vadd.f32 %v419, %v467
  %v469 = vpop.f32.mrf.mxu0
  %v470 = vadd.f32 %v421, %v469
  %471 = vmatmul.bf16.gmra.mxu0 %v332
  %v472 = vpop.f32.mrf.mxu0
  %v473 = vadd.f32 %v424, %v472
  %v474 = vpop.f32.mrf.mxu0
  %v475 = vadd.f32 %v426, %v474
  %476 = vmatmul.bf16.gmra.mxu0 %v335
  %v477 = vpop.f32.mrf.mxu0
  %v478 = vadd.f32 %v429, %v477
  %v479 = vpop.f32.mrf.mxu0
  %v480 = vadd.f32 %v431, %v479
  %481 = vmatmul.bf16.gmra.mxu0 %v338
  %v482 = vpop.f32.mrf.mxu0
  %v483 = vadd.f32 %v434, %v482
  %v484 = vpop.f32.mrf.mxu0
  %v485 = vadd.f32 %v436, %v484
  %486 = vdwg.mxu0
  %v487 = vmax.f32 %v448, 0.0
  %v488 = vmax.f32 %v450, 0.0
  %v489 = vmax.f32 %v453, 0.0
  %v490 = vmax.f32 %v455, 0.0
  %v491 = vmax.f32 %v458, 0.0
  %v492 = vmax.f32 %v460, 0.0
  %v493 = vmax.f32 %v463, 0.0
  %v494 = vmax.f32 %v465, 0.0
  %v495 = vmax.f32 %v468, 0.0
  %v496 = vmax.f32 %v470, 0.0
  %v497 = vmax.f32 %v473, 0.0
  %v498 = vmax.f32 %v475, 0.0
  %v499 = vmax.f32 %v478, 0.0
  %v500 = vmax.f32 %v480, 0.0
  %v501 = vmax.f32 %v483, 0.0
  %v502 = vmax.f32 %v485, 0.0
  %503 = vst [vmem:[%s3] sm:$0xff] %v487
  %504 = vst [vmem:[%s3 + $0x8] sm:$0xff] %v488
  %505 = vst [vmem:[%s3 + $0x10] sm:$0xff] %v489
  %506 = vst [vmem:[%s3 + $0x18] sm:$0xff] %v490
  %507 = vst [vmem:[%s3 + $0x20] sm:$0xff] %v491
  %508 = vst [vmem:[%s3 + $0x28] sm:$0xff] %v492
  %509 = vst [vmem:[%s3 + $0x30] sm:$0xff] %v493
  %510 = vst [vmem:[%s3 + $0x38] sm:$0xff] %v494
  %511 = vst [vmem:[%s3 + $0x40] sm:$0xff] %v495
  %512 = vst [vmem:[%s3 + $0x48] sm:$0xff] %v496
  %513 = vst [vmem:[%s3 + $0x50] sm:$0xff] %v497
  %514 = vst [vmem:[%s3 + $0x58] sm:$0xff] %v498
  %515 = vst [vmem:[%s3 + $0x60] sm:$0xff] %v499
  %516 = vst [vmem:[%s3 + $0x68] sm:$0xff] %v500
  %517 = vst [vmem:[%s3 + $0x70] sm:$0xff] %v501
  %518 = vst [vmem:[%s3 + $0x78] sm:$0xff] %v502
  // Predicated region
  $region14: #{scalable_resnet_forward.5} parent=0 // pred_check
    _
  $region15: #{scalable_resnet_forward.5} parent=0 // pred_check_branch
    %520 = sbr.rel (0) target = $region17
  $region16: #{scalable_resnet_forward.5} parent=0 // pred_region
    _
  $region17: #{scalable_resnet_forward.5} parent=0 // pred_fallthru
    _
  // Predicated region
  $region18: #{scalable_resnet_forward.5} parent=0 // pred_check
    _
  $region19: #{scalable_resnet_forward.5} parent=0 // pred_check_branch
    %522 = sbr.rel (0) target = $region21
  $region20: #{scalable_resnet_forward.5} parent=0 // pred_region
    _
  $region21: #{scalable_resnet_forward.5} parent=0 // pred_fallthru
    _

// kernel: scalable_resnet_forward.6
$region0: #{scalable_resnet_forward.6}
  #allocation0 [shape = 'u32[]', space=smem, size = 0x4, offset = 0x4, fixed_abs, tag = 'smem constant byte address 0x4 - core index']
  #allocation1 [shape = 'u32[72,128]{1,0:T(1,128)}', space=vmem, size = 0x9000, scoped, tag = 'internal scratch']
  %s0 = inlined_call_operand.vmem [shape: bf16[128,288], index: 0, kind: input, shape index: {}]
  %s1 = inlined_call_operand.vmem [shape: bf16[288,128], index: 1, kind: input, shape index: {}]
  %s2 = inlined_call_operand.vmem [shape: f32[1,128], index: 2, kind: input, shape index: {}]
  %s3 = inlined_call_operand.vmem [shape: f32[128,128], index: 3, kind: input, shape index: {}]
  %s4 = inlined_call_operand.vmem [shape: f32[128,128], index: 4, kind: output, shape index: {}]
  %s5 = sld [smem:[#allocation0]]
  $region26: #{scalable_resnet_forward.6} parent=0
    _
  %s7 = ssub.s32 1, %s5
  %s8 = scalar_select 0, %s7, %s5
  // Predicated region
  $region2: #{scalable_resnet_forward.6} parent=0 // pred_check
    _
  $region3: #{scalable_resnet_forward.6} parent=0 // pred_check_branch
    %10 = sbr.rel (0) target = $region5
  $region4: #{scalable_resnet_forward.6} parent=0 // pred_region
    _
  $region5: #{scalable_resnet_forward.6} parent=0 // pred_fallthru
    _
  // Predicated region
  $region6: #{scalable_resnet_forward.6} parent=0 // pred_check
    _
  $region7: #{scalable_resnet_forward.6} parent=0 // pred_check_branch
    %12 = sbr.rel (0) target = $region9
  $region8: #{scalable_resnet_forward.6} parent=0 // pred_region
    _
  $region9: #{scalable_resnet_forward.6} parent=0 // pred_fallthru
    _
  // Predicated region
  $region10: #{scalable_resnet_forward.6} parent=0 // pred_check
    _
  $region11: #{scalable_resnet_forward.6} parent=0 // pred_check_branch
    %14 = sbr.rel (0) target = $region13
  $region12: #{scalable_resnet_forward.6} parent=0 // pred_region
    _
  $region13: #{scalable_resnet_forward.6} parent=0 // pred_fallthru
    _
  // Predicated region
  $region14: #{scalable_resnet_forward.6} parent=0 // pred_check
    _
  $region15: #{scalable_resnet_forward.6} parent=0 // pred_check_branch
    %16 = sbr.rel (0) target = $region17
  $region16: #{scalable_resnet_forward.6} parent=0 // pred_region
    _
  $region17: #{scalable_resnet_forward.6} parent=0 // pred_fallthru
    _
  %v18 = vld [vmem:[%s0] sm:$0xff]
  %v19 = vld [vmem:[%s0 + $0x8] sm:$0xf]
  %v20 = vld [vmem:[%s0 + $0xc] sm:$0xff]
  %v21 = vld [vmem:[%s0 + $0x14] sm:$0xf]
  %v22 = vld [vmem:[%s0 + $0x18] sm:$0xff]
  %v23 = vld [vmem:[%s0 + $0x20] sm:$0xf]
  %v24 = vld [vmem:[%s0 + $0x24] sm:$0xff]
  %v25 = vld [vmem:[%s0 + $0x2c] sm:$0xf]
  %v26 = vld [vmem:[%s0 + $0x30] sm:$0xff]
  %v27 = vld [vmem:[%s0 + $0x38] sm:$0xf]
  %v28 = vld [vmem:[%s0 + $0x3c] sm:$0xff]
  %v29 = vld [vmem:[%s0 + $0x44] sm:$0xf]
  %v30 = vld [vmem:[%s0 + $0x48] sm:$0xff]
  %v31 = vld [vmem:[%s0 + $0x50] sm:$0xf]
  %v32 = vld [vmem:[%s0 + $0x54] sm:$0xff]
  %v33 = vld [vmem:[%s0 + $0x5c] sm:$0xf]
  %v34 = vld [vmem:[%s0 + $0x60] sm:$0xff]
  %v35 = vld [vmem:[%s0 + $0x68] sm:$0xf]
  %v36 = vld [vmem:[%s0 + $0x6c] sm:$0xff]
  %v37 = vld [vmem:[%s0 + $0x74] sm:$0xf]
  %v38 = vld [vmem:[%s0 + $0x78] sm:$0xff]
  %v39 = vld [vmem:[%s0 + $0x80] sm:$0xf]
  %v40 = vld [vmem:[%s0 + $0x84] sm:$0xff]
  %v41 = vld [vmem:[%s0 + $0x8c] sm:$0xf]
  %v42 = vld [vmem:[%s0 + $0x90] sm:$0xff]
  %v43 = vld [vmem:[%s0 + $0x98] sm:$0xf]
  %v44 = vld [vmem:[%s0 + $0x9c] sm:$0xff]
  %v45 = vld [vmem:[%s0 + $0xa4] sm:$0xf]
  %v46 = vld [vmem:[%s0 + $0xa8] sm:$0xff]
  %v47 = vld [vmem:[%s0 + $0xb0] sm:$0xf]
  %v48 = vld [vmem:[%s0 + $0xb4] sm:$0xff]
  %v49 = vld [vmem:[%s0 + $0xbc] sm:$0xf]
  %v50 = vld [vmem:[%s1] sm:$0xf]
  %v51 = vld [vmem:[%s1 + $0x4] sm:$0xf]
  %v52 = vld [vmem:[%s1 + $0x8] sm:$0xf]
  %v53 = vld [vmem:[%s1 + $0xc] sm:$0xf]
  %v54 = vld [vmem:[%s1 + $0x10] sm:$0xf]
  %v55 = vld [vmem:[%s1 + $0x14] sm:$0xf]
  %v56 = vld [vmem:[%s1 + $0x18] sm:$0xf]
  %v57 = vld [vmem:[%s1 + $0x1c] sm:$0xf]
  %v58 = vld [vmem:[%s1 + $0x20] sm:$0xf]
  %v59 = vld [vmem:[%s1 + $0x24] sm:$0xf]
  %v60 = vld [vmem:[%s1 + $0x28] sm:$0xf]
  %v61 = vld [vmem:[%s1 + $0x2c] sm:$0xf]
  %v62 = vld [vmem:[%s1 + $0x30] sm:$0xf]
  %v63 = vld [vmem:[%s1 + $0x34] sm:$0xf]
  %v64 = vld [vmem:[%s1 + $0x38] sm:$0xf]
  %v65 = vld [vmem:[%s1 + $0x3c] sm:$0xf]
  %v66 = vld [vmem:[%s1 + $0x40] sm:$0xf]
  %v67 = vld [vmem:[%s1 + $0x44] sm:$0xf]
  %v68 = vld [vmem:[%s1 + $0x48] sm:$0xf]
  %v69 = vld [vmem:[%s1 + $0x4c] sm:$0xf]
  %v70 = vld [vmem:[%s1 + $0x50] sm:$0xf]
  %v71 = vld [vmem:[%s1 + $0x54] sm:$0xf]
  %v72 = vld [vmem:[%s1 + $0x58] sm:$0xf]
  %v73 = vld [vmem:[%s1 + $0x5c] sm:$0xf]
  %v74 = vld [vmem:[%s1 + $0x60] sm:$0xf]
  %v75 = vld [vmem:[%s1 + $0x64] sm:$0xf]
  %v76 = vld [vmem:[%s1 + $0x68] sm:$0xf]
  %v77 = vld [vmem:[%s1 + $0x6c] sm:$0xf]
  %v78 = vld [vmem:[%s1 + $0x70] sm:$0xf]
  %v79 = vld [vmem:[%s1 + $0x74] sm:$0xf]
  %v80 = vld [vmem:[%s1 + $0x78] sm:$0xf]
  %v81 = vld [vmem:[%s1 + $0x7c] sm:$0xf]
  %v82 = vld [vmem:[%s1 + $0x80] sm:$0xf]
  %v83 = vld [vmem:[%s1 + $0x84] sm:$0xf]
  %v84 = vld [vmem:[%s1 + $0x88] sm:$0xf]
  %v85 = vld [vmem:[%s1 + $0x8c] sm:$0xf]
  %v86 = vld [vmem:[%s2] sm:$0x1]
  %v88 = vperm.slane %v86, 0
  %v122 = vunpack.c.l.b16 %v18
  %v123 = vunpack.c.h.b16 %v18
  %v124 = vunpack.c.l.b16 %v19
  %v125 = vunpack.c.l.b16 %v20
  %v126 = vunpack.c.h.b16 %v20
  %v127 = vunpack.c.l.b16 %v21
  %v128 = vunpack.c.l.b16 %v22
  %v129 = vunpack.c.h.b16 %v22
  %v130 = vunpack.c.l.b16 %v23
  %v131 = vunpack.c.l.b16 %v24
  %v132 = vunpack.c.h.b16 %v24
  %v133 = vunpack.c.l.b16 %v25
  %v134 = vunpack.c.l.b16 %v26
  %v135 = vunpack.c.h.b16 %v26
  %v136 = vunpack.c.l.b16 %v27
  %v137 = vunpack.c.l.b16 %v28
  %v138 = vunpack.c.h.b16 %v28
  %v139 = vunpack.c.l.b16 %v29
  %v140 = vunpack.c.l.b16 %v30
  %v141 = vunpack.c.h.b16 %v30
  %v142 = vunpack.c.l.b16 %v31
  %v143 = vunpack.c.l.b16 %v32
  %v144 = vunpack.c.h.b16 %v32
  %v145 = vunpack.c.l.b16 %v33
  %v146 = vunpack.c.l.b16 %v34
  %v147 = vunpack.c.h.b16 %v34
  %v148 = vunpack.c.l.b16 %v35
  %v149 = vunpack.c.l.b16 %v36
  %v150 = vunpack.c.h.b16 %v36
  %v151 = vunpack.c.l.b16 %v37
  %v152 = vunpack.c.l.b16 %v38
  %v153 = vunpack.c.h.b16 %v38
  %v154 = vunpack.c.l.b16 %v39
  %v155 = vunpack.c.l.b16 %v40
  %v156 = vunpack.c.h.b16 %v40
  %v157 = vunpack.c.l.b16 %v41
  %v158 = vunpack.c.l.b16 %v42
  %v159 = vunpack.c.h.b16 %v42
  %v160 = vunpack.c.l.b16 %v43
  %v161 = vunpack.c.l.b16 %v44
  %v162 = vunpack.c.h.b16 %v44
  %v163 = vunpack.c.l.b16 %v45
  %v164 = vunpack.c.l.b16 %v46
  %v165 = vunpack.c.h.b16 %v46
  %v166 = vunpack.c.l.b16 %v47
  %v167 = vunpack.c.l.b16 %v48
  %v168 = vunpack.c.h.b16 %v48
  %v169 = vunpack.c.l.b16 %v49
  %v170 = vpack.c.b16 %v125, %v122
  %v171 = vpack.c.b16 %v126, %v123
  %v172 = vpack.c.b16 %v127, %v124
  %v173 = vpack.c.b16 %v131, %v128
  %v174 = vpack.c.b16 %v132, %v129
  %v175 = vpack.c.b16 %v133, %v130
  %v176 = vpack.c.b16 %v137, %v134
  %v177 = vpack.c.b16 %v138, %v135
  %v178 = vpack.c.b16 %v139, %v136
  %v179 = vpack.c.b16 %v143, %v140
  %v180 = vpack.c.b16 %v144, %v141
  %v181 = vpack.c.b16 %v145, %v142
  %v182 = vpack.c.b16 %v149, %v146
  %v183 = vpack.c.b16 %v150, %v147
  %v184 = vpack.c.b16 %v151, %v148
  %v185 = vpack.c.b16 %v155, %v152
  %v186 = vpack.c.b16 %v156, %v153
  %v187 = vpack.c.b16 %v157, %v154
  %v188 = vpack.c.b16 %v161, %v158
  %v189 = vpack.c.b16 %v162, %v159
  %v190 = vpack.c.b16 %v163, %v160
  %v191 = vpack.c.b16 %v167, %v164
  %v192 = vpack.c.b16 %v168, %v165
  %v193 = vpack.c.b16 %v169, %v166
  %v246 = vunpack.c.l.b16 %v50
  %v247 = vunpack.c.l.b16 %v51
  %v248 = vunpack.c.l.b16 %v52
  %v249 = vunpack.c.l.b16 %v53
  %v250 = vunpack.c.l.b16 %v54
  %v251 = vunpack.c.l.b16 %v55
  %v252 = vunpack.c.l.b16 %v56
  %v253 = vunpack.c.l.b16 %v57
  %v254 = vunpack.c.l.b16 %v58
  %v255 = vunpack.c.l.b16 %v59
  %v256 = vunpack.c.l.b16 %v60
  %v257 = vunpack.c.l.b16 %v61
  %v258 = vunpack.c.l.b16 %v62
  %v259 = vunpack.c.l.b16 %v63
  %v260 = vunpack.c.l.b16 %v64
  %v261 = vunpack.c.l.b16 %v65
  %v262 = vunpack.c.l.b16 %v66
  %v263 = vunpack.c.l.b16 %v67
  %v264 = vunpack.c.l.b16 %v68
  %v265 = vunpack.c.l.b16 %v69
  %v266 = vunpack.c.l.b16 %v70
  %v267 = vunpack.c.l.b16 %v71
  %v268 = vunpack.c.l.b16 %v72
  %v269 = vunpack.c.l.b16 %v73
  %v270 = vunpack.c.l.b16 %v74
  %v271 = vunpack.c.l.b16 %v75
  %v272 = vunpack.c.l.b16 %v76
  %v273 = vunpack.c.l.b16 %v77
  %v274 = vunpack.c.l.b16 %v78
  %v275 = vunpack.c.l.b16 %v79
  %v276 = vunpack.c.l.b16 %v80
  %v277 = vunpack.c.l.b16 %v81
  %v278 = vunpack.c.l.b16 %v82
  %v279 = vunpack.c.l.b16 %v83
  %v280 = vunpack.c.l.b16 %v84
  %v281 = vunpack.c.l.b16 %v85
  %v282 = vpack.c.b16 %v247, %v246
  %v283 = vpack.c.b16 %v249, %v248
  %v284 = vpack.c.b16 %v251, %v250
  %v285 = vpack.c.b16 %v253, %v252
  %v286 = vpack.c.b16 %v255, %v254
  %v287 = vpack.c.b16 %v257, %v256
  %v288 = vpack.c.b16 %v259, %v258
  %v289 = vpack.c.b16 %v261, %v260
  %v290 = vpack.c.b16 %v263, %v262
  %v291 = vpack.c.b16 %v265, %v264
  %v292 = vpack.c.b16 %v267, %v266
  %v293 = vpack.c.b16 %v269, %v268
  %v294 = vpack.c.b16 %v271, %v270
  %v295 = vpack.c.b16 %v273, %v272
  %v296 = vpack.c.b16 %v275, %v274
  %v297 = vpack.c.b16 %v277, %v276
  %v298 = vpack.c.b16 %v279, %v278
  %v299 = vpack.c.b16 %v281, %v280
  %vm318 = vcmask 261120
  %v320 = vsel %vm318, %v172, 0
  %v323 = vsel %vm318, %v175, 0
  %v326 = vsel %vm318, %v178, 0
  %v329 = vsel %vm318, %v181, 0
  %v332 = vsel %vm318, %v184, 0
  %v335 = vsel %vm318, %v187, 0
  %v338 = vsel %vm318, %v190, 0
  %v341 = vsel %vm318, %v193, 0
  %343 = vmatpush.bf16.msra.mxu0 %v289
  %344 = vmatpush.bf16.msra.mxu0 %v288
  %345 = vmatpush.bf16.msra.mxu0 %v287
  %346 = vmatpush.bf16.msra.mxu0 %v286
  %347 = vmatpush.bf16.msra.mxu0 %v285
  %348 = vmatpush.bf16.msra.mxu0 %v284
  %349 = vmatpush.bf16.msra.mxu0 %v283
  %350 = vmatpush.bf16.msra.mxu0 %v282
  %351 = vmatmul.bf16.gmra.mxu0 %v170
  %v352 = vpop.f32.mrf.mxu0
  %v353 = vadd.f32 %v88, %v352
  %v354 = vpop.f32.mrf.mxu0
  %v355 = vadd.f32 %v88, %v354
  %356 = vmatmul.bf16.gmra.mxu0 %v173
  %v357 = vpop.f32.mrf.mxu0
  %v358 = vadd.f32 %v88, %v357
  %v359 = vpop.f32.mrf.mxu0
  %v360 = vadd.f32 %v88, %v359
  %361 = vmatmul.bf16.gmra.mxu0 %v176
  %v362 = vpop.f32.mrf.mxu0
  %v363 = vadd.f32 %v88, %v362
  %v364 = vpop.f32.mrf.mxu0
  %v365 = vadd.f32 %v88, %v364
  %366 = vmatmul.bf16.gmra.mxu0 %v179
  %v367 = vpop.f32.mrf.mxu0
  %v368 = vadd.f32 %v88, %v367
  %v369 = vpop.f32.mrf.mxu0
  %v370 = vadd.f32 %v88, %v369
  %371 = vmatmul.bf16.gmra.mxu0 %v182
  %v372 = vpop.f32.mrf.mxu0
  %v373 = vadd.f32 %v88, %v372
  %v374 = vpop.f32.mrf.mxu0
  %v375 = vadd.f32 %v88, %v374
  %376 = vmatmul.bf16.gmra.mxu0 %v185
  %v377 = vpop.f32.mrf.mxu0
  %v378 = vadd.f32 %v88, %v377
  %v379 = vpop.f32.mrf.mxu0
  %v380 = vadd.f32 %v88, %v379
  %381 = vmatmul.bf16.gmra.mxu0 %v188
  %v382 = vpop.f32.mrf.mxu0
  %v383 = vadd.f32 %v88, %v382
  %v384 = vpop.f32.mrf.mxu0
  %v385 = vadd.f32 %v88, %v384
  %386 = vmatmul.bf16.gmra.mxu0 %v191
  %v387 = vpop.f32.mrf.mxu0
  %v388 = vadd.f32 %v88, %v387
  %v389 = vpop.f32.mrf.mxu0
  %v390 = vadd.f32 %v88, %v389
  %391 = vdwg.mxu0
  %392 = vmatpush.bf16.msra.mxu0 %v297
  %393 = vmatpush.bf16.msra.mxu0 %v296
  %394 = vmatpush.bf16.msra.mxu0 %v295
  %395 = vmatpush.bf16.msra.mxu0 %v294
  %396 = vmatpush.bf16.msra.mxu0 %v293
  %397 = vmatpush.bf16.msra.mxu0 %v292
  %398 = vmatpush.bf16.msra.mxu0 %v291
  %399 = vmatpush.bf16.msra.mxu0 %v290
  %400 = vmatmul.bf16.gmra.mxu0 %v171
  %v401 = vpop.f32.mrf.mxu0
  %v402 = vadd.f32 %v353, %v401
  %v403 = vpop.f32.mrf.mxu0
  %v404 = vadd.f32 %v355, %v403
  %405 = vmatmul.bf16.gmra.mxu0 %v174
  %v406 = vpop.f32.mrf.mxu0
  %v407 = vadd.f32 %v358, %v406
  %v408 = vpop.f32.mrf.mxu0
  %v409 = vadd.f32 %v360, %v408
  %410 = vmatmul.bf16.gmra.mxu0 %v177
  %v411 = vpop.f32.mrf.mxu0
  %v412 = vadd.f32 %v363, %v411
  %v413 = vpop.f32.mrf.mxu0
  %v414 = vadd.f32 %v365, %v413
  %415 = vmatmul.bf16.gmra.mxu0 %v180
  %v416 = vpop.f32.mrf.mxu0
  %v417 = vadd.f32 %v368, %v416
  %v418 = vpop.f32.mrf.mxu0
  %v419 = vadd.f32 %v370, %v418
  %420 = vmatmul.bf16.gmra.mxu0 %v183
  %v421 = vpop.f32.mrf.mxu0
  %v422 = vadd.f32 %v373, %v421
  %v423 = vpop.f32.mrf.mxu0
  %v424 = vadd.f32 %v375, %v423
  %425 = vmatmul.bf16.gmra.mxu0 %v186
  %v426 = vpop.f32.mrf.mxu0
  %v427 = vadd.f32 %v378, %v426
  %v428 = vpop.f32.mrf.mxu0
  %v429 = vadd.f32 %v380, %v428
  %430 = vmatmul.bf16.gmra.mxu0 %v189
  %v431 = vpop.f32.mrf.mxu0
  %v432 = vadd.f32 %v383, %v431
  %v433 = vpop.f32.mrf.mxu0
  %v434 = vadd.f32 %v385, %v433
  %435 = vmatmul.bf16.gmra.mxu0 %v192
  %v436 = vpop.f32.mrf.mxu0
  %v437 = vadd.f32 %v388, %v436
  %v438 = vpop.f32.mrf.mxu0
  %v439 = vadd.f32 %v390, %v438
  %440 = vdwg.mxu0
  %441 = vmatpush.bf16.msra.mxu0 0
  %442 = vmatpush.bf16.msra.mxu0 0
  %443 = vmatpush.bf16.msra.mxu0 0
  %444 = vmatpush.bf16.msra.mxu0 0
  %445 = vmatpush.bf16.msra.mxu0 0
  %446 = vmatpush.bf16.msra.mxu0 0
  %447 = vmatpush.bf16.msra.mxu0 %v299
  %448 = vmatpush.bf16.msra.mxu0 %v298
  %449 = vmatmul.bf16.gmra.mxu0 %v320
  %v450 = vpop.f32.mrf.mxu0
  %v451 = vadd.f32 %v402, %v450
  %v452 = vpop.f32.mrf.mxu0
  %v453 = vadd.f32 %v404, %v452
  %454 = vmatmul.bf16.gmra.mxu0 %v323
  %v455 = vpop.f32.mrf.mxu0
  %v456 = vadd.f32 %v407, %v455
  %v457 = vpop.f32.mrf.mxu0
  %v458 = vadd.f32 %v409, %v457
  %459 = vmatmul.bf16.gmra.mxu0 %v326
  %v460 = vpop.f32.mrf.mxu0
  %v461 = vadd.f32 %v412, %v460
  %v462 = vpop.f32.mrf.mxu0
  %v463 = vadd.f32 %v414, %v462
  %464 = vmatmul.bf16.gmra.mxu0 %v329
  %v465 = vpop.f32.mrf.mxu0
  %v466 = vadd.f32 %v417, %v465
  %v467 = vpop.f32.mrf.mxu0
  %v468 = vadd.f32 %v419, %v467
  %469 = vmatmul.bf16.gmra.mxu0 %v332
  %v470 = vpop.f32.mrf.mxu0
  %v471 = vadd.f32 %v422, %v470
  %v472 = vpop.f32.mrf.mxu0
  %v473 = vadd.f32 %v424, %v472
  %474 = vmatmul.bf16.gmra.mxu0 %v335
  %v475 = vpop.f32.mrf.mxu0
  %v476 = vadd.f32 %v427, %v475
  %v477 = vpop.f32.mrf.mxu0
  %v478 = vadd.f32 %v429, %v477
  %479 = vmatmul.bf16.gmra.mxu0 %v338
  %v480 = vpop.f32.mrf.mxu0
  %v481 = vadd.f32 %v432, %v480
  %v482 = vpop.f32.mrf.mxu0
  %v483 = vadd.f32 %v434, %v482
  %484 = vmatmul.bf16.gmra.mxu0 %v341
  %v485 = vpop.f32.mrf.mxu0
  %v486 = vadd.f32 %v437, %v485
  %v487 = vpop.f32.mrf.mxu0
  %v488 = vadd.f32 %v439, %v487
  %489 = vdwg.mxu0
  %v490 = vld [vmem:[%s3] sm:$0xff]
  %v491 = vld [vmem:[%s3 + $0x8] sm:$0xff]
  %v492 = vld [vmem:[%s3 + $0x10] sm:$0xff]
  %v493 = vld [vmem:[%s3 + $0x18] sm:$0xff]
  %v494 = vld [vmem:[%s3 + $0x20] sm:$0xff]
  %v495 = vld [vmem:[%s3 + $0x28] sm:$0xff]
  %v496 = vld [vmem:[%s3 + $0x30] sm:$0xff]
  %v497 = vld [vmem:[%s3 + $0x38] sm:$0xff]
  %v498 = vld [vmem:[%s3 + $0x40] sm:$0xff]
  %v499 = vld [vmem:[%s3 + $0x48] sm:$0xff]
  %v500 = vld [vmem:[%s3 + $0x50] sm:$0xff]
  %v501 = vld [vmem:[%s3 + $0x58] sm:$0xff]
  %v502 = vld [vmem:[%s3 + $0x60] sm:$0xff]
  %v503 = vld [vmem:[%s3 + $0x68] sm:$0xff]
  %v504 = vld [vmem:[%s3 + $0x70] sm:$0xff]
  %v505 = vld [vmem:[%s3 + $0x78] sm:$0xff]
  %v506 = vadd.f32 %v451, %v490
  %v507 = vadd.f32 %v453, %v491
  %v508 = vadd.f32 %v456, %v492
  %v509 = vadd.f32 %v458, %v493
  %v510 = vadd.f32 %v461, %v494
  %v511 = vadd.f32 %v463, %v495
  %v512 = vadd.f32 %v466, %v496
  %v513 = vadd.f32 %v468, %v497
  %v514 = vadd.f32 %v471, %v498
  %v515 = vadd.f32 %v473, %v499
  %v516 = vadd.f32 %v476, %v500
  %v517 = vadd.f32 %v478, %v501
  %v518 = vadd.f32 %v481, %v502
  %v519 = vadd.f32 %v483, %v503
  %v520 = vadd.f32 %v486, %v504
  %v521 = vadd.f32 %v488, %v505
  %v522 = vmax.f32 %v506, 0.0
  %v523 = vmax.f32 %v507, 0.0
  %v524 = vmax.f32 %v508, 0.0
  %v525 = vmax.f32 %v509, 0.0
  %v526 = vmax.f32 %v510, 0.0
  %v527 = vmax.f32 %v511, 0.0
  %v528 = vmax.f32 %v512, 0.0
  %v529 = vmax.f32 %v513, 0.0
  %v530 = vmax.f32 %v514, 0.0
  %v531 = vmax.f32 %v515, 0.0
  %v532 = vmax.f32 %v516, 0.0
  %v533 = vmax.f32 %v517, 0.0
  %v534 = vmax.f32 %v518, 0.0
  %v535 = vmax.f32 %v519, 0.0
  %v536 = vmax.f32 %v520, 0.0
  %v537 = vmax.f32 %v521, 0.0
  %538 = vst [vmem:[%s4] sm:$0xff] %v522
  %539 = vst [vmem:[%s4 + $0x8] sm:$0xff] %v523
  %540 = vst [vmem:[%s4 + $0x10] sm:$0xff] %v524
  %541 = vst [vmem:[%s4 + $0x18] sm:$0xff] %v525
  %542 = vst [vmem:[%s4 + $0x20] sm:$0xff] %v526
  %543 = vst [vmem:[%s4 + $0x28] sm:$0xff] %v527
  %544 = vst [vmem:[%s4 + $0x30] sm:$0xff] %v528
  %545 = vst [vmem:[%s4 + $0x38] sm:$0xff] %v529
  %546 = vst [vmem:[%s4 + $0x40] sm:$0xff] %v530
  %547 = vst [vmem:[%s4 + $0x48] sm:$0xff] %v531
  %548 = vst [vmem:[%s4 + $0x50] sm:$0xff] %v532
  %549 = vst [vmem:[%s4 + $0x58] sm:$0xff] %v533
  %550 = vst [vmem:[%s4 + $0x60] sm:$0xff] %v534
  %551 = vst [vmem:[%s4 + $0x68] sm:$0xff] %v535
  %552 = vst [vmem:[%s4 + $0x70] sm:$0xff] %v536
  %553 = vst [vmem:[%s4 + $0x78] sm:$0xff] %v537
  // Predicated region
  $region18: #{scalable_resnet_forward.6} parent=0 // pred_check
    _
  $region19: #{scalable_resnet_forward.6} parent=0 // pred_check_branch
    %555 = sbr.rel (0) target = $region21
  $region20: #{scalable_resnet_forward.6} parent=0 // pred_region
    _
  $region21: #{scalable_resnet_forward.6} parent=0 // pred_fallthru
    _
  // Predicated region
  $region22: #{scalable_resnet_forward.6} parent=0 // pred_check
    _
  $region23: #{scalable_resnet_forward.6} parent=0 // pred_check_branch
    %557 = sbr.rel (0) target = $region25
  $region24: #{scalable_resnet_forward.6} parent=0 // pred_region
    _
  $region25: #{scalable_resnet_forward.6} parent=0 // pred_fallthru
    _

// kernel: scalable_resnet_forward.7
$region0: #{scalable_resnet_forward.7}
  #allocation0 [shape = 'u32[]', space=smem, size = 0x4, offset = 0x4, fixed_abs, tag = 'smem constant byte address 0x4 - core index']
  #allocation1 [shape = 'u32[72,128]{1,0:T(1,128)}', space=vmem, size = 0x9000, scoped, tag = 'internal scratch']
  %s0 = inlined_call_operand.vmem [shape: bf16[8,2048], index: 0, kind: input, shape index: {}]
  %s1 = inlined_call_operand.vmem [shape: bf16[2048,128], index: 1, kind: input, shape index: {}]
  %s2 = inlined_call_operand.vmem [shape: f32[1,128], index: 2, kind: input, shape index: {}]
  %s3 = inlined_call_operand.vmem [shape: f32[8,128], index: 3, kind: output, shape index: {}]
  %s4 = sld [smem:[#allocation0]]
  $region22: #{scalable_resnet_forward.7} parent=0
    _
  %s6 = ssub.s32 1, %s4
  %s7 = scalar_select 0, %s6, %s4
  // Predicated region
  $region2: #{scalable_resnet_forward.7} parent=0 // pred_check
    _
  $region3: #{scalable_resnet_forward.7} parent=0 // pred_check_branch
    %9 = sbr.rel (0) target = $region5
  $region4: #{scalable_resnet_forward.7} parent=0 // pred_region
    _
  $region5: #{scalable_resnet_forward.7} parent=0 // pred_fallthru
    _
  // Predicated region
  $region6: #{scalable_resnet_forward.7} parent=0 // pred_check
    _
  $region7: #{scalable_resnet_forward.7} parent=0 // pred_check_branch
    %11 = sbr.rel (0) target = $region9
  $region8: #{scalable_resnet_forward.7} parent=0 // pred_region
    _
  $region9: #{scalable_resnet_forward.7} parent=0 // pred_fallthru
    _
  // Predicated region
  $region10: #{scalable_resnet_forward.7} parent=0 // pred_check
    _
  $region11: #{scalable_resnet_forward.7} parent=0 // pred_check_branch
    %13 = sbr.rel (0) target = $region13
  $region12: #{scalable_resnet_forward.7} parent=0 // pred_region
    _
  $region13: #{scalable_resnet_forward.7} parent=0 // pred_fallthru
    _
  %v14 = vld [vmem:[%s0] sm:$0xff]
  %v15 = vld [vmem:[%s0 + $0x8] sm:$0xff]
  %v16 = vld [vmem:[%s0 + $0x10] sm:$0xff]
  %v17 = vld [vmem:[%s0 + $0x18] sm:$0xff]
  %v18 = vld [vmem:[%s0 + $0x20] sm:$0xff]
  %v19 = vld [vmem:[%s0 + $0x28] sm:$0xff]
  %v20 = vld [vmem:[%s0 + $0x30] sm:$0xff]
  %v21 = vld [vmem:[%s0 + $0x38] sm:$0xff]
  %v22 = vld [vmem:[%s1] sm:$0xf]
  %v23 = vld [vmem:[%s1 + $0x4] sm:$0xf]
  %v24 = vld [vmem:[%s1 + $0x8] sm:$0xf]
  %v25 = vld [vmem:[%s1 + $0xc] sm:$0xf]
  %v26 = vld [vmem:[%s1 + $0x10] sm:$0xf]
  %v27 = vld [vmem:[%s1 + $0x14] sm:$0xf]
  %v28 = vld [vmem:[%s1 + $0x18] sm:$0xf]
  %v29 = vld [vmem:[%s1 + $0x1c] sm:$0xf]
  %v30 = vld [vmem:[%s1 + $0x20] sm:$0xf]
  %v31 = vld [vmem:[%s1 + $0x24] sm:$0xf]
  %v32 = vld [vmem:[%s1 + $0x28] sm:$0xf]
  %v33 = vld [vmem:[%s1 + $0x2c] sm:$0xf]
  %v34 = vld [vmem:[%s1 + $0x30] sm:$0xf]
  %v35 = vld [vmem:[%s1 + $0x34] sm:$0xf]
  %v36 = vld [vmem:[%s1 + $0x38] sm:$0xf]
  %v37 = vld [vmem:[%s1 + $0x3c] sm:$0xf]
  %v38 = vld [vmem:[%s1 + $0x40] sm:$0xf]
  %v39 = vld [vmem:[%s1 + $0x44] sm:$0xf]
  %v40 = vld [vmem:[%s1 + $0x48] sm:$0xf]
  %v41 = vld [vmem:[%s1 + $0x4c] sm:$0xf]
  %v42 = vld [vmem:[%s1 + $0x50] sm:$0xf]
  %v43 = vld [vmem:[%s1 + $0x54] sm:$0xf]
  %v44 = vld [vmem:[%s1 + $0x58] sm:$0xf]
  %v45 = vld [vmem:[%s1 + $0x5c] sm:$0xf]
  %v46 = vld [vmem:[%s1 + $0x60] sm:$0xf]
  %v47 = vld [vmem:[%s1 + $0x64] sm:$0xf]
  %v48 = vld [vmem:[%s1 + $0x68] sm:$0xf]
  %v49 = vld [vmem:[%s1 + $0x6c] sm:$0xf]
  %v50 = vld [vmem:[%s1 + $0x70] sm:$0xf]
  %v51 = vld [vmem:[%s1 + $0x74] sm:$0xf]
  %v52 = vld [vmem:[%s1 + $0x78] sm:$0xf]
  %v53 = vld [vmem:[%s1 + $0x7c] sm:$0xf]
  %v54 = vld [vmem:[%s1 + $0x80] sm:$0xf]
  %v55 = vld [vmem:[%s1 + $0x84] sm:$0xf]
  %v56 = vld [vmem:[%s1 + $0x88] sm:$0xf]
  %v57 = vld [vmem:[%s1 + $0x8c] sm:$0xf]
  %v58 = vld [vmem:[%s1 + $0x90] sm:$0xf]
  %v59 = vld [vmem:[%s1 + $0x94] sm:$0xf]
  %v60 = vld [vmem:[%s1 + $0x98] sm:$0xf]
  %v61 = vld [vmem:[%s1 + $0x9c] sm:$0xf]
  %v62 = vld [vmem:[%s1 + $0xa0] sm:$0xf]
  %v63 = vld [vmem:[%s1 + $0xa4] sm:$0xf]
  %v64 = vld [vmem:[%s1 + $0xa8] sm:$0xf]
  %v65 = vld [vmem:[%s1 + $0xac] sm:$0xf]
  %v66 = vld [vmem:[%s1 + $0xb0] sm:$0xf]
  %v67 = vld [vmem:[%s1 + $0xb4] sm:$0xf]
  %v68 = vld [vmem:[%s1 + $0xb8] sm:$0xf]
  %v69 = vld [vmem:[%s1 + $0xbc] sm:$0xf]
  %v70 = vld [vmem:[%s1 + $0xc0] sm:$0xf]
  %v71 = vld [vmem:[%s1 + $0xc4] sm:$0xf]
  %v72 = vld [vmem:[%s1 + $0xc8] sm:$0xf]
  %v73 = vld [vmem:[%s1 + $0xcc] sm:$0xf]
  %v74 = vld [vmem:[%s1 + $0xd0] sm:$0xf]
  %v75 = vld [vmem:[%s1 + $0xd4] sm:$0xf]
  %v76 = vld [vmem:[%s1 + $0xd8] sm:$0xf]
  %v77 = vld [vmem:[%s1 + $0xdc] sm:$0xf]
  %v78 = vld [vmem:[%s1 + $0xe0] sm:$0xf]
  %v79 = vld [vmem:[%s1 + $0xe4] sm:$0xf]
  %v80 = vld [vmem:[%s1 + $0xe8] sm:$0xf]
  %v81 = vld [vmem:[%s1 + $0xec] sm:$0xf]
  %v82 = vld [vmem:[%s1 + $0xf0] sm:$0xf]
  %v83 = vld [vmem:[%s1 + $0xf4] sm:$0xf]
  %v84 = vld [vmem:[%s1 + $0xf8] sm:$0xf]
  %v85 = vld [vmem:[%s1 + $0xfc] sm:$0xf]
  %v86 = vld [vmem:[%s1 + $0x100] sm:$0xf]
  %v87 = vld [vmem:[%s1 + $0x104] sm:$0xf]
  %v88 = vld [vmem:[%s1 + $0x108] sm:$0xf]
  %v89 = vld [vmem:[%s1 + $0x10c] sm:$0xf]
  %v90 = vld [vmem:[%s1 + $0x110] sm:$0xf]
  %v91 = vld [vmem:[%s1 + $0x114] sm:$0xf]
  %v92 = vld [vmem:[%s1 + $0x118] sm:$0xf]
  %v93 = vld [vmem:[%s1 + $0x11c] sm:$0xf]
  %v94 = vld [vmem:[%s1 + $0x120] sm:$0xf]
  %v95 = vld [vmem:[%s1 + $0x124] sm:$0xf]
  %v96 = vld [vmem:[%s1 + $0x128] sm:$0xf]
  %v97 = vld [vmem:[%s1 + $0x12c] sm:$0xf]
  %v98 = vld [vmem:[%s1 + $0x130] sm:$0xf]
  %v99 = vld [vmem:[%s1 + $0x134] sm:$0xf]
  %v100 = vld [vmem:[%s1 + $0x138] sm:$0xf]
  %v101 = vld [vmem:[%s1 + $0x13c] sm:$0xf]
  %v102 = vld [vmem:[%s1 + $0x140] sm:$0xf]
  %v103 = vld [vmem:[%s1 + $0x144] sm:$0xf]
  %v104 = vld [vmem:[%s1 + $0x148] sm:$0xf]
  %v105 = vld [vmem:[%s1 + $0x14c] sm:$0xf]
  %v106 = vld [vmem:[%s1 + $0x150] sm:$0xf]
  %v107 = vld [vmem:[%s1 + $0x154] sm:$0xf]
  %v108 = vld [vmem:[%s1 + $0x158] sm:$0xf]
  %v109 = vld [vmem:[%s1 + $0x15c] sm:$0xf]
  %v110 = vld [vmem:[%s1 + $0x160] sm:$0xf]
  %v111 = vld [vmem:[%s1 + $0x164] sm:$0xf]
  %v112 = vld [vmem:[%s1 + $0x168] sm:$0xf]
  %v113 = vld [vmem:[%s1 + $0x16c] sm:$0xf]
  %v114 = vld [vmem:[%s1 + $0x170] sm:$0xf]
  %v115 = vld [vmem:[%s1 + $0x174] sm:$0xf]
  %v116 = vld [vmem:[%s1 + $0x178] sm:$0xf]
  %v117 = vld [vmem:[%s1 + $0x17c] sm:$0xf]
  %v118 = vld [vmem:[%s1 + $0x180] sm:$0xf]
  %v119 = vld [vmem:[%s1 + $0x184] sm:$0xf]
  %v120 = vld [vmem:[%s1 + $0x188] sm:$0xf]
  %v121 = vld [vmem:[%s1 + $0x18c] sm:$0xf]
  %v122 = vld [vmem:[%s1 + $0x190] sm:$0xf]
  %v123 = vld [vmem:[%s1 + $0x194] sm:$0xf]
  %v124 = vld [vmem:[%s1 + $0x198] sm:$0xf]
  %v125 = vld [vmem:[%s1 + $0x19c] sm:$0xf]
  %v126 = vld [vmem:[%s1 + $0x1a0] sm:$0xf]
  %v127 = vld [vmem:[%s1 + $0x1a4] sm:$0xf]
  %v128 = vld [vmem:[%s1 + $0x1a8] sm:$0xf]
  %v129 = vld [vmem:[%s1 + $0x1ac] sm:$0xf]
  %v130 = vld [vmem:[%s1 + $0x1b0] sm:$0xf]
  %v131 = vld [vmem:[%s1 + $0x1b4] sm:$0xf]
  %v132 = vld [vmem:[%s1 + $0x1b8] sm:$0xf]
  %v133 = vld [vmem:[%s1 + $0x1bc] sm:$0xf]
  %v134 = vld [vmem:[%s1 + $0x1c0] sm:$0xf]
  %v135 = vld [vmem:[%s1 + $0x1c4] sm:$0xf]
  %v136 = vld [vmem:[%s1 + $0x1c8] sm:$0xf]
  %v137 = vld [vmem:[%s1 + $0x1cc] sm:$0xf]
  %v138 = vld [vmem:[%s1 + $0x1d0] sm:$0xf]
  %v139 = vld [vmem:[%s1 + $0x1d4] sm:$0xf]
  %v140 = vld [vmem:[%s1 + $0x1d8] sm:$0xf]
  %v141 = vld [vmem:[%s1 + $0x1dc] sm:$0xf]
  %v142 = vld [vmem:[%s1 + $0x1e0] sm:$0xf]
  %v143 = vld [vmem:[%s1 + $0x1e4] sm:$0xf]
  %v144 = vld [vmem:[%s1 + $0x1e8] sm:$0xf]
  %v145 = vld [vmem:[%s1 + $0x1ec] sm:$0xf]
  %v146 = vld [vmem:[%s1 + $0x1f0] sm:$0xf]
  %v147 = vld [vmem:[%s1 + $0x1f4] sm:$0xf]
  %v148 = vld [vmem:[%s1 + $0x1f8] sm:$0xf]
  %v149 = vld [vmem:[%s1 + $0x1fc] sm:$0xf]
  %v150 = vld [vmem:[%s1 + $0x200] sm:$0xf]
  %v151 = vld [vmem:[%s1 + $0x204] sm:$0xf]
  %v152 = vld [vmem:[%s1 + $0x208] sm:$0xf]
  %v153 = vld [vmem:[%s1 + $0x20c] sm:$0xf]
  %v154 = vld [vmem:[%s1 + $0x210] sm:$0xf]
  %v155 = vld [vmem:[%s1 + $0x214] sm:$0xf]
  %v156 = vld [vmem:[%s1 + $0x218] sm:$0xf]
  %v157 = vld [vmem:[%s1 + $0x21c] sm:$0xf]
  %v158 = vld [vmem:[%s1 + $0x220] sm:$0xf]
  %v159 = vld [vmem:[%s1 + $0x224] sm:$0xf]
  %v160 = vld [vmem:[%s1 + $0x228] sm:$0xf]
  %v161 = vld [vmem:[%s1 + $0x22c] sm:$0xf]
  %v162 = vld [vmem:[%s1 + $0x230] sm:$0xf]
  %v163 = vld [vmem:[%s1 + $0x234] sm:$0xf]
  %v164 = vld [vmem:[%s1 + $0x238] sm:$0xf]
  %v165 = vld [vmem:[%s1 + $0x23c] sm:$0xf]
  %v166 = vld [vmem:[%s1 + $0x240] sm:$0xf]
  %v167 = vld [vmem:[%s1 + $0x244] sm:$0xf]
  %v168 = vld [vmem:[%s1 + $0x248] sm:$0xf]
  %v169 = vld [vmem:[%s1 + $0x24c] sm:$0xf]
  %v170 = vld [vmem:[%s1 + $0x250] sm:$0xf]
  %v171 = vld [vmem:[%s1 + $0x254] sm:$0xf]
  %v172 = vld [vmem:[%s1 + $0x258] sm:$0xf]
  %v173 = vld [vmem:[%s1 + $0x25c] sm:$0xf]
  %v174 = vld [vmem:[%s1 + $0x260] sm:$0xf]
  %v175 = vld [vmem:[%s1 + $0x264] sm:$0xf]
  %v176 = vld [vmem:[%s1 + $0x268] sm:$0xf]
  %v177 = vld [vmem:[%s1 + $0x26c] sm:$0xf]
  %v178 = vld [vmem:[%s1 + $0x270] sm:$0xf]
  %v179 = vld [vmem:[%s1 + $0x274] sm:$0xf]
  %v180 = vld [vmem:[%s1 + $0x278] sm:$0xf]
  %v181 = vld [vmem:[%s1 + $0x27c] sm:$0xf]
  %v182 = vld [vmem:[%s1 + $0x280] sm:$0xf]
  %v183 = vld [vmem:[%s1 + $0x284] sm:$0xf]
  %v184 = vld [vmem:[%s1 + $0x288] sm:$0xf]
  %v185 = vld [vmem:[%s1 + $0x28c] sm:$0xf]
  %v186 = vld [vmem:[%s1 + $0x290] sm:$0xf]
  %v187 = vld [vmem:[%s1 + $0x294] sm:$0xf]
  %v188 = vld [vmem:[%s1 + $0x298] sm:$0xf]
  %v189 = vld [vmem:[%s1 + $0x29c] sm:$0xf]
  %v190 = vld [vmem:[%s1 + $0x2a0] sm:$0xf]
  %v191 = vld [vmem:[%s1 + $0x2a4] sm:$0xf]
  %v192 = vld [vmem:[%s1 + $0x2a8] sm:$0xf]
  %v193 = vld [vmem:[%s1 + $0x2ac] sm:$0xf]
  %v194 = vld [vmem:[%s1 + $0x2b0] sm:$0xf]
  %v195 = vld [vmem:[%s1 + $0x2b4] sm:$0xf]
  %v196 = vld [vmem:[%s1 + $0x2b8] sm:$0xf]
  %v197 = vld [vmem:[%s1 + $0x2bc] sm:$0xf]
  %v198 = vld [vmem:[%s1 + $0x2c0] sm:$0xf]
  %v199 = vld [vmem:[%s1 + $0x2c4] sm:$0xf]
  %v200 = vld [vmem:[%s1 + $0x2c8] sm:$0xf]
  %v201 = vld [vmem:[%s1 + $0x2cc] sm:$0xf]
  %v202 = vld [vmem:[%s1 + $0x2d0] sm:$0xf]
  %v203 = vld [vmem:[%s1 + $0x2d4] sm:$0xf]
  %v204 = vld [vmem:[%s1 + $0x2d8] sm:$0xf]
  %v205 = vld [vmem:[%s1 + $0x2dc] sm:$0xf]
  %v206 = vld [vmem:[%s1 + $0x2e0] sm:$0xf]
  %v207 = vld [vmem:[%s1 + $0x2e4] sm:$0xf]
  %v208 = vld [vmem:[%s1 + $0x2e8] sm:$0xf]
  %v209 = vld [vmem:[%s1 + $0x2ec] sm:$0xf]
  %v210 = vld [vmem:[%s1 + $0x2f0] sm:$0xf]
  %v211 = vld [vmem:[%s1 + $0x2f4] sm:$0xf]
  %v212 = vld [vmem:[%s1 + $0x2f8] sm:$0xf]
  %v213 = vld [vmem:[%s1 + $0x2fc] sm:$0xf]
  %v214 = vld [vmem:[%s1 + $0x300] sm:$0xf]
  %v215 = vld [vmem:[%s1 + $0x304] sm:$0xf]
  %v216 = vld [vmem:[%s1 + $0x308] sm:$0xf]
  %v217 = vld [vmem:[%s1 + $0x30c] sm:$0xf]
  %v218 = vld [vmem:[%s1 + $0x310] sm:$0xf]
  %v219 = vld [vmem:[%s1 + $0x314] sm:$0xf]
  %v220 = vld [vmem:[%s1 + $0x318] sm:$0xf]
  %v221 = vld [vmem:[%s1 + $0x31c] sm:$0xf]
  %v222 = vld [vmem:[%s1 + $0x320] sm:$0xf]
  %v223 = vld [vmem:[%s1 + $0x324] sm:$0xf]
  %v224 = vld [vmem:[%s1 + $0x328] sm:$0xf]
  %v225 = vld [vmem:[%s1 + $0x32c] sm:$0xf]
  %v226 = vld [vmem:[%s1 + $0x330] sm:$0xf]
  %v227 = vld [vmem:[%s1 + $0x334] sm:$0xf]
  %v228 = vld [vmem:[%s1 + $0x338] sm:$0xf]
  %v229 = vld [vmem:[%s1 + $0x33c] sm:$0xf]
  %v230 = vld [vmem:[%s1 + $0x340] sm:$0xf]
  %v231 = vld [vmem:[%s1 + $0x344] sm:$0xf]
  %v232 = vld [vmem:[%s1 + $0x348] sm:$0xf]
  %v233 = vld [vmem:[%s1 + $0x34c] sm:$0xf]
  %v234 = vld [vmem:[%s1 + $0x350] sm:$0xf]
  %v235 = vld [vmem:[%s1 + $0x354] sm:$0xf]
  %v236 = vld [vmem:[%s1 + $0x358] sm:$0xf]
  %v237 = vld [vmem:[%s1 + $0x35c] sm:$0xf]
  %v238 = vld [vmem:[%s1 + $0x360] sm:$0xf]
  %v239 = vld [vmem:[%s1 + $0x364] sm:$0xf]
  %v240 = vld [vmem:[%s1 + $0x368] sm:$0xf]
  %v241 = vld [vmem:[%s1 + $0x36c] sm:$0xf]
  %v242 = vld [vmem:[%s1 + $0x370] sm:$0xf]
  %v243 = vld [vmem:[%s1 + $0x374] sm:$0xf]
  %v244 = vld [vmem:[%s1 + $0x378] sm:$0xf]
  %v245 = vld [vmem:[%s1 + $0x37c] sm:$0xf]
  %v246 = vld [vmem:[%s1 + $0x380] sm:$0xf]
  %v247 = vld [vmem:[%s1 + $0x384] sm:$0xf]
  %v248 = vld [vmem:[%s1 + $0x388] sm:$0xf]
  %v249 = vld [vmem:[%s1 + $0x38c] sm:$0xf]
  %v250 = vld [vmem:[%s1 + $0x390] sm:$0xf]
  %v251 = vld [vmem:[%s1 + $0x394] sm:$0xf]
  %v252 = vld [vmem:[%s1 + $0x398] sm:$0xf]
  %v253 = vld [vmem:[%s1 + $0x39c] sm:$0xf]
  %v254 = vld [vmem:[%s1 + $0x3a0] sm:$0xf]
  %v255 = vld [vmem:[%s1 + $0x3a4] sm:$0xf]
  %v256 = vld [vmem:[%s1 + $0x3a8] sm:$0xf]
  %v257 = vld [vmem:[%s1 + $0x3ac] sm:$0xf]
  %v258 = vld [vmem:[%s1 + $0x3b0] sm:$0xf]
  %v259 = vld [vmem:[%s1 + $0x3b4] sm:$0xf]
  %v260 = vld [vmem:[%s1 + $0x3b8] sm:$0xf]
  %v261 = vld [vmem:[%s1 + $0x3bc] sm:$0xf]
  %v262 = vld [vmem:[%s1 + $0x3c0] sm:$0xf]
  %v263 = vld [vmem:[%s1 + $0x3c4] sm:$0xf]
  %v264 = vld [vmem:[%s1 + $0x3c8] sm:$0xf]
  %v265 = vld [vmem:[%s1 + $0x3cc] sm:$0xf]
  %v266 = vld [vmem:[%s1 + $0x3d0] sm:$0xf]
  %v267 = vld [vmem:[%s1 + $0x3d4] sm:$0xf]
  %v268 = vld [vmem:[%s1 + $0x3d8] sm:$0xf]
  %v269 = vld [vmem:[%s1 + $0x3dc] sm:$0xf]
  %v270 = vld [vmem:[%s1 + $0x3e0] sm:$0xf]
  %v271 = vld [vmem:[%s1 + $0x3e4] sm:$0xf]
  %v272 = vld [vmem:[%s1 + $0x3e8] sm:$0xf]
  %v273 = vld [vmem:[%s1 + $0x3ec] sm:$0xf]
  %v274 = vld [vmem:[%s1 + $0x3f0] sm:$0xf]
  %v275 = vld [vmem:[%s1 + $0x3f4] sm:$0xf]
  %v276 = vld [vmem:[%s1 + $0x3f8] sm:$0xf]
  %v277 = vld [vmem:[%s1 + $0x3fc] sm:$0xf]
  %v278 = vld [vmem:[%s2] sm:$0x1]
  %v280 = vperm.slane %v278, 0
  %v290 = vunpack.c.l.b16 %v14
  %v291 = vunpack.c.h.b16 %v14
  %v292 = vunpack.c.l.b16 %v15
  %v293 = vunpack.c.h.b16 %v15
  %v294 = vunpack.c.l.b16 %v16
  %v295 = vunpack.c.h.b16 %v16
  %v296 = vunpack.c.l.b16 %v17
  %v297 = vunpack.c.h.b16 %v17
  %v298 = vunpack.c.l.b16 %v18
  %v299 = vunpack.c.h.b16 %v18
  %v300 = vunpack.c.l.b16 %v19
  %v301 = vunpack.c.h.b16 %v19
  %v302 = vunpack.c.l.b16 %v20
  %v303 = vunpack.c.h.b16 %v20
  %v304 = vunpack.c.l.b16 %v21
  %v305 = vunpack.c.h.b16 %v21
  %v306 = vpack.c.b16 %v290, %v290
  %v307 = vpack.c.b16 %v291, %v291
  %v308 = vpack.c.b16 %v292, %v292
  %v309 = vpack.c.b16 %v293, %v293
  %v310 = vpack.c.b16 %v294, %v294
  %v311 = vpack.c.b16 %v295, %v295
  %v312 = vpack.c.b16 %v296, %v296
  %v313 = vpack.c.b16 %v297, %v297
  %v314 = vpack.c.b16 %v298, %v298
  %v315 = vpack.c.b16 %v299, %v299
  %v316 = vpack.c.b16 %v300, %v300
  %v317 = vpack.c.b16 %v301, %v301
  %v318 = vpack.c.b16 %v302, %v302
  %v319 = vpack.c.b16 %v303, %v303
  %v320 = vpack.c.b16 %v304, %v304
  %v321 = vpack.c.b16 %v305, %v305
  %v594 = vunpack.c.l.b16 %v22
  %v595 = vunpack.c.l.b16 %v23
  %v596 = vunpack.c.l.b16 %v24
  %v597 = vunpack.c.l.b16 %v25
  %v598 = vunpack.c.l.b16 %v26
  %v599 = vunpack.c.l.b16 %v27
  %v600 = vunpack.c.l.b16 %v28
  %v601 = vunpack.c.l.b16 %v29
  %v602 = vunpack.c.l.b16 %v30
  %v603 = vunpack.c.l.b16 %v31
  %v604 = vunpack.c.l.b16 %v32
  %v605 = vunpack.c.l.b16 %v33
  %v606 = vunpack.c.l.b16 %v34
  %v607 = vunpack.c.l.b16 %v35
  %v608 = vunpack.c.l.b16 %v36
  %v609 = vunpack.c.l.b16 %v37
  %v610 = vunpack.c.l.b16 %v38
  %v611 = vunpack.c.l.b16 %v39
  %v612 = vunpack.c.l.b16 %v40
  %v613 = vunpack.c.l.b16 %v41
  %v614 = vunpack.c.l.b16 %v42
  %v615 = vunpack.c.l.b16 %v43
  %v616 = vunpack.c.l.b16 %v44
  %v617 = vunpack.c.l.b16 %v45
  %v618 = vunpack.c.l.b16 %v46
  %v619 = vunpack.c.l.b16 %v47
  %v620 = vunpack.c.l.b16 %v48
  %v621 = vunpack.c.l.b16 %v49
  %v622 = vunpack.c.l.b16 %v50
  %v623 = vunpack.c.l.b16 %v51
  %v624 = vunpack.c.l.b16 %v52
  %v625 = vunpack.c.l.b16 %v53
  %v626 = vunpack.c.l.b16 %v54
  %v627 = vunpack.c.l.b16 %v55
  %v628 = vunpack.c.l.b16 %v56
  %v629 = vunpack.c.l.b16 %v57
  %v630 = vunpack.c.l.b16 %v58
  %v631 = vunpack.c.l.b16 %v59
  %v632 = vunpack.c.l.b16 %v60
  %v633 = vunpack.c.l.b16 %v61
  %v634 = vunpack.c.l.b16 %v62
  %v635 = vunpack.c.l.b16 %v63
  %v636 = vunpack.c.l.b16 %v64
  %v637 = vunpack.c.l.b16 %v65
  %v638 = vunpack.c.l.b16 %v66
  %v639 = vunpack.c.l.b16 %v67
  %v640 = vunpack.c.l.b16 %v68
  %v641 = vunpack.c.l.b16 %v69
  %v642 = vunpack.c.l.b16 %v70
  %v643 = vunpack.c.l.b16 %v71
  %v644 = vunpack.c.l.b16 %v72
  %v645 = vunpack.c.l.b16 %v73
  %v646 = vunpack.c.l.b16 %v74
  %v647 = vunpack.c.l.b16 %v75
  %v648 = vunpack.c.l.b16 %v76
  %v649 = vunpack.c.l.b16 %v77
  %v650 = vunpack.c.l.b16 %v78
  %v651 = vunpack.c.l.b16 %v79
  %v652 = vunpack.c.l.b16 %v80
  %v653 = vunpack.c.l.b16 %v81
  %v654 = vunpack.c.l.b16 %v82
  %v655 = vunpack.c.l.b16 %v83
  %v656 = vunpack.c.l.b16 %v84
  %v657 = vunpack.c.l.b16 %v85
  %v658 = vunpack.c.l.b16 %v86
  %v659 = vunpack.c.l.b16 %v87
  %v660 = vunpack.c.l.b16 %v88
  %v661 = vunpack.c.l.b16 %v89
  %v662 = vunpack.c.l.b16 %v90
  %v663 = vunpack.c.l.b16 %v91
  %v664 = vunpack.c.l.b16 %v92
  %v665 = vunpack.c.l.b16 %v93
  %v666 = vunpack.c.l.b16 %v94
  %v667 = vunpack.c.l.b16 %v95
  %v668 = vunpack.c.l.b16 %v96
  %v669 = vunpack.c.l.b16 %v97
  %v670 = vunpack.c.l.b16 %v98
  %v671 = vunpack.c.l.b16 %v99
  %v672 = vunpack.c.l.b16 %v100
  %v673 = vunpack.c.l.b16 %v101
  %v674 = vunpack.c.l.b16 %v102
  %v675 = vunpack.c.l.b16 %v103
  %v676 = vunpack.c.l.b16 %v104
  %v677 = vunpack.c.l.b16 %v105
  %v678 = vunpack.c.l.b16 %v106
  %v679 = vunpack.c.l.b16 %v107
  %v680 = vunpack.c.l.b16 %v108
  %v681 = vunpack.c.l.b16 %v109
  %v682 = vunpack.c.l.b16 %v110
  %v683 = vunpack.c.l.b16 %v111
  %v684 = vunpack.c.l.b16 %v112
  %v685 = vunpack.c.l.b16 %v113
  %v686 = vunpack.c.l.b16 %v114
  %v687 = vunpack.c.l.b16 %v115
  %v688 = vunpack.c.l.b16 %v116
  %v689 = vunpack.c.l.b16 %v117
  %v690 = vunpack.c.l.b16 %v118
  %v691 = vunpack.c.l.b16 %v119
  %v692 = vunpack.c.l.b16 %v120
  %v693 = vunpack.c.l.b16 %v121
  %v694 = vunpack.c.l.b16 %v122
  %v695 = vunpack.c.l.b16 %v123
  %v696 = vunpack.c.l.b16 %v124
  %v697 = vunpack.c.l.b16 %v125
  %v698 = vunpack.c.l.b16 %v126
  %v699 = vunpack.c.l.b16 %v127
  %v700 = vunpack.c.l.b16 %v128
  %v701 = vunpack.c.l.b16 %v129
  %v702 = vunpack.c.l.b16 %v130
  %v703 = vunpack.c.l.b16 %v131
  %v704 = vunpack.c.l.b16 %v132
  %v705 = vunpack.c.l.b16 %v133
  %v706 = vunpack.c.l.b16 %v134
  %v707 = vunpack.c.l.b16 %v135
  %v708 = vunpack.c.l.b16 %v136
  %v709 = vunpack.c.l.b16 %v137
  %v710 = vunpack.c.l.b16 %v138
  %v711 = vunpack.c.l.b16 %v139
  %v712 = vunpack.c.l.b16 %v140
  %v713 = vunpack.c.l.b16 %v141
  %v714 = vunpack.c.l.b16 %v142
  %v715 = vunpack.c.l.b16 %v143
  %v716 = vunpack.c.l.b16 %v144
  %v717 = vunpack.c.l.b16 %v145
  %v718 = vunpack.c.l.b16 %v146
  %v719 = vunpack.c.l.b16 %v147
  %v720 = vunpack.c.l.b16 %v148
  %v721 = vunpack.c.l.b16 %v149
  %v722 = vunpack.c.l.b16 %v150
  %v723 = vunpack.c.l.b16 %v151
  %v724 = vunpack.c.l.b16 %v152
  %v725 = vunpack.c.l.b16 %v153
  %v726 = vunpack.c.l.b16 %v154
  %v727 = vunpack.c.l.b16 %v155
  %v728 = vunpack.c.l.b16 %v156
  %v729 = vunpack.c.l.b16 %v157
  %v730 = vunpack.c.l.b16 %v158
  %v731 = vunpack.c.l.b16 %v159
  %v732 = vunpack.c.l.b16 %v160
  %v733 = vunpack.c.l.b16 %v161
  %v734 = vunpack.c.l.b16 %v162
  %v735 = vunpack.c.l.b16 %v163
  %v736 = vunpack.c.l.b16 %v164
  %v737 = vunpack.c.l.b16 %v165
  %v738 = vunpack.c.l.b16 %v166
  %v739 = vunpack.c.l.b16 %v167
  %v740 = vunpack.c.l.b16 %v168
  %v741 = vunpack.c.l.b16 %v169
  %v742 = vunpack.c.l.b16 %v170
  %v743 = vunpack.c.l.b16 %v171
  %v744 = vunpack.c.l.b16 %v172
  %v745 = vunpack.c.l.b16 %v173
  %v746 = vunpack.c.l.b16 %v174
  %v747 = vunpack.c.l.b16 %v175
  %v748 = vunpack.c.l.b16 %v176
  %v749 = vunpack.c.l.b16 %v177
  %v750 = vunpack.c.l.b16 %v178
  %v751 = vunpack.c.l.b16 %v179
  %v752 = vunpack.c.l.b16 %v180
  %v753 = vunpack.c.l.b16 %v181
  %v754 = vunpack.c.l.b16 %v182
  %v755 = vunpack.c.l.b16 %v183
  %v756 = vunpack.c.l.b16 %v184
  %v757 = vunpack.c.l.b16 %v185
  %v758 = vunpack.c.l.b16 %v186
  %v759 = vunpack.c.l.b16 %v187
  %v760 = vunpack.c.l.b16 %v188
  %v761 = vunpack.c.l.b16 %v189
  %v762 = vunpack.c.l.b16 %v190
  %v763 = vunpack.c.l.b16 %v191
  %v764 = vunpack.c.l.b16 %v192
  %v765 = vunpack.c.l.b16 %v193
  %v766 = vunpack.c.l.b16 %v194
  %v767 = vunpack.c.l.b16 %v195
  %v768 = vunpack.c.l.b16 %v196
  %v769 = vunpack.c.l.b16 %v197
  %v770 = vunpack.c.l.b16 %v198
  %v771 = vunpack.c.l.b16 %v199
  %v772 = vunpack.c.l.b16 %v200
  %v773 = vunpack.c.l.b16 %v201
  %v774 = vunpack.c.l.b16 %v202
  %v775 = vunpack.c.l.b16 %v203
  %v776 = vunpack.c.l.b16 %v204
  %v777 = vunpack.c.l.b16 %v205
  %v778 = vunpack.c.l.b16 %v206
  %v779 = vunpack.c.l.b16 %v207
  %v780 = vunpack.c.l.b16 %v208
  %v781 = vunpack.c.l.b16 %v209
  %v782 = vunpack.c.l.b16 %v210
  %v783 = vunpack.c.l.b16 %v211
  %v784 = vunpack.c.l.b16 %v212
  %v785 = vunpack.c.l.b16 %v213
  %v786 = vunpack.c.l.b16 %v214
  %v787 = vunpack.c.l.b16 %v215
  %v788 = vunpack.c.l.b16 %v216
  %v789 = vunpack.c.l.b16 %v217
  %v790 = vunpack.c.l.b16 %v218
  %v791 = vunpack.c.l.b16 %v219
  %v792 = vunpack.c.l.b16 %v220
  %v793 = vunpack.c.l.b16 %v221
  %v794 = vunpack.c.l.b16 %v222
  %v795 = vunpack.c.l.b16 %v223
  %v796 = vunpack.c.l.b16 %v224
  %v797 = vunpack.c.l.b16 %v225
  %v798 = vunpack.c.l.b16 %v226
  %v799 = vunpack.c.l.b16 %v227
  %v800 = vunpack.c.l.b16 %v228
  %v801 = vunpack.c.l.b16 %v229
  %v802 = vunpack.c.l.b16 %v230
  %v803 = vunpack.c.l.b16 %v231
  %v804 = vunpack.c.l.b16 %v232
  %v805 = vunpack.c.l.b16 %v233
  %v806 = vunpack.c.l.b16 %v234
  %v807 = vunpack.c.l.b16 %v235
  %v808 = vunpack.c.l.b16 %v236
  %v809 = vunpack.c.l.b16 %v237
  %v810 = vunpack.c.l.b16 %v238
  %v811 = vunpack.c.l.b16 %v239
  %v812 = vunpack.c.l.b16 %v240
  %v813 = vunpack.c.l.b16 %v241
  %v814 = vunpack.c.l.b16 %v242
  %v815 = vunpack.c.l.b16 %v243
  %v816 = vunpack.c.l.b16 %v244
  %v817 = vunpack.c.l.b16 %v245
  %v818 = vunpack.c.l.b16 %v246
  %v819 = vunpack.c.l.b16 %v247
  %v820 = vunpack.c.l.b16 %v248
  %v821 = vunpack.c.l.b16 %v249
  %v822 = vunpack.c.l.b16 %v250
  %v823 = vunpack.c.l.b16 %v251
  %v824 = vunpack.c.l.b16 %v252
  %v825 = vunpack.c.l.b16 %v253
  %v826 = vunpack.c.l.b16 %v254
  %v827 = vunpack.c.l.b16 %v255
  %v828 = vunpack.c.l.b16 %v256
  %v829 = vunpack.c.l.b16 %v257
  %v830 = vunpack.c.l.b16 %v258
  %v831 = vunpack.c.l.b16 %v259
  %v832 = vunpack.c.l.b16 %v260
  %v833 = vunpack.c.l.b16 %v261
  %v834 = vunpack.c.l.b16 %v262
  %v835 = vunpack.c.l.b16 %v263
  %v836 = vunpack.c.l.b16 %v264
  %v837 = vunpack.c.l.b16 %v265
  %v838 = vunpack.c.l.b16 %v266
  %v839 = vunpack.c.l.b16 %v267
  %v840 = vunpack.c.l.b16 %v268
  %v841 = vunpack.c.l.b16 %v269
  %v842 = vunpack.c.l.b16 %v270
  %v843 = vunpack.c.l.b16 %v271
  %v844 = vunpack.c.l.b16 %v272
  %v845 = vunpack.c.l.b16 %v273
  %v846 = vunpack.c.l.b16 %v274
  %v847 = vunpack.c.l.b16 %v275
  %v848 = vunpack.c.l.b16 %v276
  %v849 = vunpack.c.l.b16 %v277
  %v850 = vpack.c.b16 %v595, %v594
  %v851 = vpack.c.b16 %v597, %v596
  %v852 = vpack.c.b16 %v599, %v598
  %v853 = vpack.c.b16 %v601, %v600
  %v854 = vpack.c.b16 %v603, %v602
  %v855 = vpack.c.b16 %v605, %v604
  %v856 = vpack.c.b16 %v607, %v606
  %v857 = vpack.c.b16 %v609, %v608
  %v858 = vpack.c.b16 %v611, %v610
  %v859 = vpack.c.b16 %v613, %v612
  %v860 = vpack.c.b16 %v615, %v614
  %v861 = vpack.c.b16 %v617, %v616
  %v862 = vpack.c.b16 %v619, %v618
  %v863 = vpack.c.b16 %v621, %v620
  %v864 = vpack.c.b16 %v623, %v622
  %v865 = vpack.c.b16 %v625, %v624
  %v866 = vpack.c.b16 %v627, %v626
  %v867 = vpack.c.b16 %v629, %v628
  %v868 = vpack.c.b16 %v631, %v630
  %v869 = vpack.c.b16 %v633, %v632
  %v870 = vpack.c.b16 %v635, %v634
  %v871 = vpack.c.b16 %v637, %v636
  %v872 = vpack.c.b16 %v639, %v638
  %v873 = vpack.c.b16 %v641, %v640
  %v874 = vpack.c.b16 %v643, %v642
  %v875 = vpack.c.b16 %v645, %v644
  %v876 = vpack.c.b16 %v647, %v646
  %v877 = vpack.c.b16 %v649, %v648
  %v878 = vpack.c.b16 %v651, %v650
  %v879 = vpack.c.b16 %v653, %v652
  %v880 = vpack.c.b16 %v655, %v654
  %v881 = vpack.c.b16 %v657, %v656
  %v882 = vpack.c.b16 %v659, %v658
  %v883 = vpack.c.b16 %v661, %v660
  %v884 = vpack.c.b16 %v663, %v662
  %v885 = vpack.c.b16 %v665, %v664
  %v886 = vpack.c.b16 %v667, %v666
  %v887 = vpack.c.b16 %v669, %v668
  %v888 = vpack.c.b16 %v671, %v670
  %v889 = vpack.c.b16 %v673, %v672
  %v890 = vpack.c.b16 %v675, %v674
  %v891 = vpack.c.b16 %v677, %v676
  %v892 = vpack.c.b16 %v679, %v678
  %v893 = vpack.c.b16 %v681, %v680
  %v894 = vpack.c.b16 %v683, %v682
  %v895 = vpack.c.b16 %v685, %v684
  %v896 = vpack.c.b16 %v687, %v686
  %v897 = vpack.c.b16 %v689, %v688
  %v898 = vpack.c.b16 %v691, %v690
  %v899 = vpack.c.b16 %v693, %v692
  %v900 = vpack.c.b16 %v695, %v694
  %v901 = vpack.c.b16 %v697, %v696
  %v902 = vpack.c.b16 %v699, %v698
  %v903 = vpack.c.b16 %v701, %v700
  %v904 = vpack.c.b16 %v703, %v702
  %v905 = vpack.c.b16 %v705, %v704
  %v906 = vpack.c.b16 %v707, %v706
  %v907 = vpack.c.b16 %v709, %v708
  %v908 = vpack.c.b16 %v711, %v710
  %v909 = vpack.c.b16 %v713, %v712
  %v910 = vpack.c.b16 %v715, %v714
  %v911 = vpack.c.b16 %v717, %v716
  %v912 = vpack.c.b16 %v719, %v718
  %v913 = vpack.c.b16 %v721, %v720
  %v914 = vpack.c.b16 %v723, %v722
  %v915 = vpack.c.b16 %v725, %v724
  %v916 = vpack.c.b16 %v727, %v726
  %v917 = vpack.c.b16 %v729, %v728
  %v918 = vpack.c.b16 %v731, %v730
  %v919 = vpack.c.b16 %v733, %v732
  %v920 = vpack.c.b16 %v735, %v734
  %v921 = vpack.c.b16 %v737, %v736
  %v922 = vpack.c.b16 %v739, %v738
  %v923 = vpack.c.b16 %v741, %v740
  %v924 = vpack.c.b16 %v743, %v742
  %v925 = vpack.c.b16 %v745, %v744
  %v926 = vpack.c.b16 %v747, %v746
  %v927 = vpack.c.b16 %v749, %v748
  %v928 = vpack.c.b16 %v751, %v750
  %v929 = vpack.c.b16 %v753, %v752
  %v930 = vpack.c.b16 %v755, %v754
  %v931 = vpack.c.b16 %v757, %v756
  %v932 = vpack.c.b16 %v759, %v758
  %v933 = vpack.c.b16 %v761, %v760
  %v934 = vpack.c.b16 %v763, %v762
  %v935 = vpack.c.b16 %v765, %v764
  %v936 = vpack.c.b16 %v767, %v766
  %v937 = vpack.c.b16 %v769, %v768
  %v938 = vpack.c.b16 %v771, %v770
  %v939 = vpack.c.b16 %v773, %v772
  %v940 = vpack.c.b16 %v775, %v774
  %v941 = vpack.c.b16 %v777, %v776
  %v942 = vpack.c.b16 %v779, %v778
  %v943 = vpack.c.b16 %v781, %v780
  %v944 = vpack.c.b16 %v783, %v782
  %v945 = vpack.c.b16 %v785, %v784
  %v946 = vpack.c.b16 %v787, %v786
  %v947 = vpack.c.b16 %v789, %v788
  %v948 = vpack.c.b16 %v791, %v790
  %v949 = vpack.c.b16 %v793, %v792
  %v950 = vpack.c.b16 %v795, %v794
  %v951 = vpack.c.b16 %v797, %v796
  %v952 = vpack.c.b16 %v799, %v798
  %v953 = vpack.c.b16 %v801, %v800
  %v954 = vpack.c.b16 %v803, %v802
  %v955 = vpack.c.b16 %v805, %v804
  %v956 = vpack.c.b16 %v807, %v806
  %v957 = vpack.c.b16 %v809, %v808
  %v958 = vpack.c.b16 %v811, %v810
  %v959 = vpack.c.b16 %v813, %v812
  %v960 = vpack.c.b16 %v815, %v814
  %v961 = vpack.c.b16 %v817, %v816
  %v962 = vpack.c.b16 %v819, %v818
  %v963 = vpack.c.b16 %v821, %v820
  %v964 = vpack.c.b16 %v823, %v822
  %v965 = vpack.c.b16 %v825, %v824
  %v966 = vpack.c.b16 %v827, %v826
  %v967 = vpack.c.b16 %v829, %v828
  %v968 = vpack.c.b16 %v831, %v830
  %v969 = vpack.c.b16 %v833, %v832
  %v970 = vpack.c.b16 %v835, %v834
  %v971 = vpack.c.b16 %v837, %v836
  %v972 = vpack.c.b16 %v839, %v838
  %v973 = vpack.c.b16 %v841, %v840
  %v974 = vpack.c.b16 %v843, %v842
  %v975 = vpack.c.b16 %v845, %v844
  %v976 = vpack.c.b16 %v847, %v846
  %v977 = vpack.c.b16 %v849, %v848
  %1106 = vmatpush.bf16.msra.mxu0 %v857
  %1107 = vmatpush.bf16.msra.mxu0 %v856
  %1108 = vmatpush.bf16.msra.mxu0 %v855
  %1109 = vmatpush.bf16.msra.mxu0 %v854
  %1110 = vmatpush.bf16.msra.mxu0 %v853
  %1111 = vmatpush.bf16.msra.mxu0 %v852
  %1112 = vmatpush.bf16.msra.mxu0 %v851
  %1113 = vmatpush.bf16.msra.mxu0 %v850
  %1114 = vmatmul.bf16.gmra.mxu0 %v306
  %v1115 = vpop.f32.mrf.mxu0
  %v1116 = vadd.f32 %v280, %v1115
  %v1117 = vpop.f32.mrf.mxu0
  %1118 = vdwg.mxu0
  %1119 = vmatpush.bf16.msra.mxu0 %v865
  %1120 = vmatpush.bf16.msra.mxu0 %v864
  %1121 = vmatpush.bf16.msra.mxu0 %v863
  %1122 = vmatpush.bf16.msra.mxu0 %v862
  %1123 = vmatpush.bf16.msra.mxu0 %v861
  %1124 = vmatpush.bf16.msra.mxu0 %v860
  %1125 = vmatpush.bf16.msra.mxu0 %v859
  %1126 = vmatpush.bf16.msra.mxu0 %v858
  %1127 = vmatmul.bf16.gmra.mxu0 %v307
  %v1128 = vpop.f32.mrf.mxu0
  %v1129 = vadd.f32 %v1116, %v1128
  %v1130 = vpop.f32.mrf.mxu0
  %1131 = vdwg.mxu0
  %1132 = vmatpush.bf16.msra.mxu0 %v873
  %1133 = vmatpush.bf16.msra.mxu0 %v872
  %1134 = vmatpush.bf16.msra.mxu0 %v871
  %1135 = vmatpush.bf16.msra.mxu0 %v870
  %1136 = vmatpush.bf16.msra.mxu0 %v869
  %1137 = vmatpush.bf16.msra.mxu0 %v868
  %1138 = vmatpush.bf16.msra.mxu0 %v867
  %1139 = vmatpush.bf16.msra.mxu0 %v866
  %1140 = vmatmul.bf16.gmra.mxu0 %v308
  %v1141 = vpop.f32.mrf.mxu0
  %v1142 = vadd.f32 %v1129, %v1141
  %v1143 = vpop.f32.mrf.mxu0
  %1144 = vdwg.mxu0
  %1145 = vmatpush.bf16.msra.mxu0 %v881
  %1146 = vmatpush.bf16.msra.mxu0 %v880
  %1147 = vmatpush.bf16.msra.mxu0 %v879
  %1148 = vmatpush.bf16.msra.mxu0 %v878
  %1149 = vmatpush.bf16.msra.mxu0 %v877
  %1150 = vmatpush.bf16.msra.mxu0 %v876
  %1151 = vmatpush.bf16.msra.mxu0 %v875
  %1152 = vmatpush.bf16.msra.mxu0 %v874
  %1153 = vmatmul.bf16.gmra.mxu0 %v309
  %v1154 = vpop.f32.mrf.mxu0
  %v1155 = vadd.f32 %v1142, %v1154
  %v1156 = vpop.f32.mrf.mxu0
  %1157 = vdwg.mxu0
  %1158 = vmatpush.bf16.msra.mxu0 %v889
  %1159 = vmatpush.bf16.msra.mxu0 %v888
  %1160 = vmatpush.bf16.msra.mxu0 %v887
  %1161 = vmatpush.bf16.msra.mxu0 %v886
  %1162 = vmatpush.bf16.msra.mxu0 %v885
  %1163 = vmatpush.bf16.msra.mxu0 %v884
  %1164 = vmatpush.bf16.msra.mxu0 %v883
  %1165 = vmatpush.bf16.msra.mxu0 %v882
  %1166 = vmatmul.bf16.gmra.mxu0 %v310
  %v1167 = vpop.f32.mrf.mxu0
  %v1168 = vadd.f32 %v1155, %v1167
  %v1169 = vpop.f32.mrf.mxu0
  %1170 = vdwg.mxu0
  %1171 = vmatpush.bf16.msra.mxu0 %v897
  %1172 = vmatpush.bf16.msra.mxu0 %v896
  %1173 = vmatpush.bf16.msra.mxu0 %v895
  %1174 = vmatpush.bf16.msra.mxu0 %v894
  %1175 = vmatpush.bf16.msra.mxu0 %v893
  %1176 = vmatpush.bf16.msra.mxu0 %v892
  %1177 = vmatpush.bf16.msra.mxu0 %v891
  %1178 = vmatpush.bf16.msra.mxu0 %v890
  %1179 = vmatmul.bf16.gmra.mxu0 %v311
  %v1180 = vpop.f32.mrf.mxu0
  %v1181 = vadd.f32 %v1168, %v1180
  %v1182 = vpop.f32.mrf.mxu0
  %1183 = vdwg.mxu0
  %1184 = vmatpush.bf16.msra.mxu0 %v905
  %1185 = vmatpush.bf16.msra.mxu0 %v904
  %1186 = vmatpush.bf16.msra.mxu0 %v903
  %1187 = vmatpush.bf16.msra.mxu0 %v902
  %1188 = vmatpush.bf16.msra.mxu0 %v901
  %1189 = vmatpush.bf16.msra.mxu0 %v900
  %1190 = vmatpush.bf16.msra.mxu0 %v899
  %1191 = vmatpush.bf16.msra.mxu0 %v898
  %1192 = vmatmul.bf16.gmra.mxu0 %v312
  %v1193 = vpop.f32.mrf.mxu0
  %v1194 = vadd.f32 %v1181, %v1193
  %v1195 = vpop.f32.mrf.mxu0
  %1196 = vdwg.mxu0
  %1197 = vmatpush.bf16.msra.mxu0 %v913
  %1198 = vmatpush.bf16.msra.mxu0 %v912
  %1199 = vmatpush.bf16.msra.mxu0 %v911
  %1200 = vmatpush.bf16.msra.mxu0 %v910
  %1201 = vmatpush.bf16.msra.mxu0 %v909
  %1202 = vmatpush.bf16.msra.mxu0 %v908
  %1203 = vmatpush.bf16.msra.mxu0 %v907
  %1204 = vmatpush.bf16.msra.mxu0 %v906
  %1205 = vmatmul.bf16.gmra.mxu0 %v313
  %v1206 = vpop.f32.mrf.mxu0
  %v1207 = vadd.f32 %v1194, %v1206
  %v1208 = vpop.f32.mrf.mxu0
  %1209 = vdwg.mxu0
  %1210 = vmatpush.bf16.msra.mxu0 %v921
  %1211 = vmatpush.bf16.msra.mxu0 %v920
  %1212 = vmatpush.bf16.msra.mxu0 %v919
  %1213 = vmatpush.bf16.msra.mxu0 %v918
  %1214 = vmatpush.bf16.msra.mxu0 %v917
  %1215 = vmatpush.bf16.msra.mxu0 %v916
  %1216 = vmatpush.bf16.msra.mxu0 %v915
  %1217 = vmatpush.bf16.msra.mxu0 %v914
  %1218 = vmatmul.bf16.gmra.mxu0 %v314
  %v1219 = vpop.f32.mrf.mxu0
  %v1220 = vadd.f32 %v1207, %v1219
  %v1221 = vpop.f32.mrf.mxu0
  %1222 = vdwg.mxu0
  %1223 = vmatpush.bf16.msra.mxu0 %v929
  %1224 = vmatpush.bf16.msra.mxu0 %v928
  %1225 = vmatpush.bf16.msra.mxu0 %v927
  %1226 = vmatpush.bf16.msra.mxu0 %v926
  %1227 = vmatpush.bf16.msra.mxu0 %v925
  %1228 = vmatpush.bf16.msra.mxu0 %v924
  %1229 = vmatpush.bf16.msra.mxu0 %v923
  %1230 = vmatpush.bf16.msra.mxu0 %v922
  %1231 = vmatmul.bf16.gmra.mxu0 %v315
  %v1232 = vpop.f32.mrf.mxu0
  %v1233 = vadd.f32 %v1220, %v1232
  %v1234 = vpop.f32.mrf.mxu0
  %1235 = vdwg.mxu0
  %1236 = vmatpush.bf16.msra.mxu0 %v937
  %1237 = vmatpush.bf16.msra.mxu0 %v936
  %1238 = vmatpush.bf16.msra.mxu0 %v935
  %1239 = vmatpush.bf16.msra.mxu0 %v934
  %1240 = vmatpush.bf16.msra.mxu0 %v933
  %1241 = vmatpush.bf16.msra.mxu0 %v932
  %1242 = vmatpush.bf16.msra.mxu0 %v931
  %1243 = vmatpush.bf16.msra.mxu0 %v930
  %1244 = vmatmul.bf16.gmra.mxu0 %v316
  %v1245 = vpop.f32.mrf.mxu0
  %v1246 = vadd.f32 %v1233, %v1245
  %v1247 = vpop.f32.mrf.mxu0
  %1248 = vdwg.mxu0
  %1249 = vmatpush.bf16.msra.mxu0 %v945
  %1250 = vmatpush.bf16.msra.mxu0 %v944
  %1251 = vmatpush.bf16.msra.mxu0 %v943
  %1252 = vmatpush.bf16.msra.mxu0 %v942
  %1253 = vmatpush.bf16.msra.mxu0 %v941
  %1254 = vmatpush.bf16.msra.mxu0 %v940
  %1255 = vmatpush.bf16.msra.mxu0 %v939
  %1256 = vmatpush.bf16.msra.mxu0 %v938
  %1257 = vmatmul.bf16.gmra.mxu0 %v317
  %v1258 = vpop.f32.mrf.mxu0
  %v1259 = vadd.f32 %v1246, %v1258
  %v1260 = vpop.f32.mrf.mxu0
  %1261 = vdwg.mxu0
  %1262 = vmatpush.bf16.msra.mxu0 %v953
  %1263 = vmatpush.bf16.msra.mxu0 %v952
  %1264 = vmatpush.bf16.msra.mxu0 %v951
  %1265 = vmatpush.bf16.msra.mxu0 %v950
  %1266 = vmatpush.bf16.msra.mxu0 %v949
  %1267 = vmatpush.bf16.msra.mxu0 %v948
  %1268 = vmatpush.bf16.msra.mxu0 %v947
  %1269 = vmatpush.bf16.msra.mxu0 %v946
  %1270 = vmatmul.bf16.gmra.mxu0 %v318
  %v1271 = vpop.f32.mrf.mxu0
  %v1272 = vadd.f32 %v1259, %v1271
  %v1273 = vpop.f32.mrf.mxu0
  %1274 = vdwg.mxu0
  %1275 = vmatpush.bf16.msra.mxu0 %v961
  %1276 = vmatpush.bf16.msra.mxu0 %v960
  %1277 = vmatpush.bf16.msra.mxu0 %v959
  %1278 = vmatpush.bf16.msra.mxu0 %v958
  %1279 = vmatpush.bf16.msra.mxu0 %v957
  %1280 = vmatpush.bf16.msra.mxu0 %v956
  %1281 = vmatpush.bf16.msra.mxu0 %v955
  %1282 = vmatpush.bf16.msra.mxu0 %v954
  %1283 = vmatmul.bf16.gmra.mxu0 %v319
  %v1284 = vpop.f32.mrf.mxu0
  %v1285 = vadd.f32 %v1272, %v1284
  %v1286 = vpop.f32.mrf.mxu0
  %1287 = vdwg.mxu0
  %1288 = vmatpush.bf16.msra.mxu0 %v969
  %1289 = vmatpush.bf16.msra.mxu0 %v968
  %1290 = vmatpush.bf16.msra.mxu0 %v967
  %1291 = vmatpush.bf16.msra.mxu0 %v966
  %1292 = vmatpush.bf16.msra.mxu0 %v965
  %1293 = vmatpush.bf16.msra.mxu0 %v964
  %1294 = vmatpush.bf16.msra.mxu0 %v963
  %1295 = vmatpush.bf16.msra.mxu0 %v962
  %1296 = vmatmul.bf16.gmra.mxu0 %v320
  %v1297 = vpop.f32.mrf.mxu0
  %v1298 = vadd.f32 %v1285, %v1297
  %v1299 = vpop.f32.mrf.mxu0
  %1300 = vdwg.mxu0
  %1301 = vmatpush.bf16.msra.mxu0 %v977
  %1302 = vmatpush.bf16.msra.mxu0 %v976
  %1303 = vmatpush.bf16.msra.mxu0 %v975
  %1304 = vmatpush.bf16.msra.mxu0 %v974
  %1305 = vmatpush.bf16.msra.mxu0 %v973
  %1306 = vmatpush.bf16.msra.mxu0 %v972
  %1307 = vmatpush.bf16.msra.mxu0 %v971
  %1308 = vmatpush.bf16.msra.mxu0 %v970
  %1309 = vmatmul.bf16.gmra.mxu0 %v321
  %v1310 = vpop.f32.mrf.mxu0
  %v1311 = vadd.f32 %v1298, %v1310
  %v1312 = vpop.f32.mrf.mxu0
  %1313 = vdwg.mxu0
  %1314 = vst [vmem:[%s3] sm:$0xff] %v1311
  // Predicated region
  $region14: #{scalable_resnet_forward.7} parent=0 // pred_check
    _
  $region15: #{scalable_resnet_forward.7} parent=0 // pred_check_branch
    %1316 = sbr.rel (0) target = $region17
  $region16: #{scalable_resnet_forward.7} parent=0 // pred_region
    _
  $region17: #{scalable_resnet_forward.7} parent=0 // pred_fallthru
    _
  // Predicated region
  $region18: #{scalable_resnet_forward.7} parent=0 // pred_check
    _
  $region19: #{scalable_resnet_forward.7} parent=0 // pred_check_branch
    %1318 = sbr.rel (0) target = $region21
  $region20: #{scalable_resnet_forward.7} parent=0 // pred_region
    _
  $region21: #{scalable_resnet_forward.7} parent=0 // pred_fallthru
    _

</llo_original>
